<compile_context>
chip_gen: v7x
topology: tpu7x:2x2x1
jax: 0.10.0
libtpu: 0.0.40
codegen_flags: <defaults>
</compile_context>

<pallas_src>
import functools

import jax
import jax.numpy as jnp
from jax.experimental import pallas as pl
from jax.experimental.pallas import tpu as pltpu


def _round_up(x, m):
    return (x + m - 1) // m * m


def _vmem_budget_bytes():
    """Per-generation VMEM capacity minus ~16 MiB headroom."""
    try:
        info = pltpu.get_tpu_info()
        cap = int(getattr(info, "vmem_capacity_bytes", 0)) or (128 << 20)
    except Exception:  # not on TPU / older API: assume 128 MiB
        cap = 128 << 20
    return cap - (16 << 20)


def _weight_spec(block_shape, index_map, single_buffer):
    """BlockSpec for a grid-invariant block; single-buffer it when possible."""
    if single_buffer and hasattr(pl, "Buffered"):
        try:
            return pl.BlockSpec(block_shape, index_map, pipeline_mode=pl.Buffered(1))
        except TypeError:
            pass
    return pl.BlockSpec(block_shape, index_map)


# --------------------------------------------------------------------------- #
# Resident-weight kernel: all expert weights (+ folded router) live in VMEM.  #
# --------------------------------------------------------------------------- #
def _moe_resident_kernel(h_ref, wc_ref, bc_ref, out_ref, *, num_experts):
    """Router softmax + score-weighted expert mixture for one token tile.

    h_ref  : (TM, Hp)             bf16 token tile
    wc_ref : (Hp, E*Hp + 128)     bf16 [expert_0^T | ... | expert_{E-1}^T | router^T]
    bc_ref : (1,  E*Hp + 128)     f32 matching biases
    out_ref: (TM, Hp)             mixture output ("logits" in the torch module)
    """
    hp = out_ref.shape[-1]
    roff = num_experts * hp
    h = h_ref[...]

    # --- router logits from the last 128 lanes of the fused weight block ------
    r = (jnp.dot(h, wc_ref[:, roff:roff + 128], preferred_element_type=jnp.float32)
         + bc_ref[:, roff:roff + 128])
    lane = jax.lax.broadcasted_iota(jnp.int32, r.shape, 1)
    r = jnp.where(lane < num_experts, r, -jnp.inf)           # mask lane padding
    r = r - jnp.max(r, axis=-1, keepdims=True)
    p = jnp.exp(r)
    scores = p * pl.reciprocal(jnp.sum(p, axis=-1, keepdims=True), approx=True)

    # --- per-expert dots on static 128-aligned slices (no (TM,E*Hp) f32 blob) --
    acc = None
    for e in range(num_experts):                  # E is small: static unroll
        eo = (jnp.dot(h, wc_ref[:, e * hp:(e + 1) * hp],
                      preferred_element_type=jnp.float32)
              + bc_ref[:, e * hp:(e + 1) * hp])
        term = scores[:, e:e + 1] * eo
        acc = term if acc is None else acc + term
    out_ref[...] = acc.astype(out_ref.dtype)


# --------------------------------------------------------------------------- #
# Expert-streaming fallback: grid = (token tiles, experts).                   #
# --------------------------------------------------------------------------- #
def _moe_stream_kernel(h_ref, wr_ref, br_ref, we_ref, be_ref, out_ref,
                       scores_sc, acc_sc, *, num_experts):
    """Used when the concatenated weights do not fit the VMEM budget (v7x).

    h_ref : (TM, Hp) bf16   wr_ref: (Hp, 128) bf16   br_ref: (1, 128) f32
    we_ref: (1, Hp, Hp) bf16 (expert e)   be_ref: (1, 1, Hp) f32
    scores_sc: (TM, 128) f32 scratch      acc_sc: (TM, Hp) f32 scratch
    """
    e = pl.program_id(1)
    h = h_ref[...]

    @pl.when(e == 0)
    def _():
        r = jnp.dot(h, wr_ref[...], preferred_element_type=jnp.float32) + br_ref[...]
        lane = jax.lax.broadcasted_iota(jnp.int32, r.shape, 1)
        r = jnp.where(lane < num_experts, r, -jnp.inf)
        r = r - jnp.max(r, axis=-1, keepdims=True)
        p = jnp.exp(r)
        scores_sc[...] = p * pl.reciprocal(jnp.sum(p, axis=-1, keepdims=True),
                                           approx=True)
        acc_sc[...] = jnp.zeros_like(acc_sc)

    eo = jnp.dot(h, we_ref[0], preferred_element_type=jnp.float32) + be_ref[0]
    scores = scores_sc[...]
    lane = jax.lax.broadcasted_iota(jnp.int32, scores.shape, 1)
    w_e = jnp.sum(jnp.where(lane == e, scores, 0.0), axis=-1, keepdims=True)
    acc_sc[...] += w_e * eo

    @pl.when(e == num_experts - 1)
    def _():
        out_ref[...] = acc_sc[...].astype(out_ref.dtype)


def switch_moe_head(hidden, wr, br, we, be, *, tile_m=512,
                    compute_dtype=jnp.bfloat16, out_dtype=jnp.float32,
                    force_stream=False):
    """hidden: (B, S, H) -> mixture logits (B, S, H) via a Pallas kernel.

    Parameters use the torch.nn.Linear convention:
      wr: (E, H)    router weight      br: (E,)   router bias
      we: (E, H, H) expert weights     be: (E, H) expert biases
    """
    B, S, H = hidden.shape
    E = wr.shape[0]
    M = B * S

    Hp = _round_up(H, 128)                      # lane-dense output & weight slices
    # Token tile: cap at tile_m but keep >= 2 tiles so both v7x TCs get work.
    tm = max(8, min(_round_up(tile_m, 8), _round_up(pl.cdiv(M, 2), 8)))
    Mp = _round_up(M, tm)
    grid_m = Mp // tm

    # ---- one-time host/XLA-side packing: pad + transpose + cast ---------------
    h2 = jnp.pad(hidden.reshape(M, H), ((0, Mp - M), (0, Hp - H))).astype(compute_dtype)

    wr_t = jnp.pad(wr.T, ((0, Hp - H), (0, 128 - E))).astype(compute_dtype)  # (Hp,128)
    br_p = jnp.pad(br, (0, 128 - E)).reshape(1, 128).astype(jnp.float32)     # (1,128)

    we_t = jnp.transpose(we, (0, 2, 1))                                      # (E,Hin,Hout)
    we_t = jnp.pad(we_t, ((0, 0), (0, Hp - H), (0, Hp - H))).astype(compute_dtype)
    be_p = jnp.pad(be, ((0, 0), (0, Hp - H))).astype(jnp.float32)            # (E,Hp)

    budget = _vmem_budget_bytes()
    cdt = jnp.dtype(compute_dtype).itemsize
    odt = jnp.dtype(out_dtype).itemsize

    # VMEM estimate for the resident path: single-buffered weights, double-
    # buffered token tiles, in-kernel f32 intermediates + compiler scratch.
    w_res = Hp * (E * Hp + 128) * cdt + (E * Hp + 128) * 4
    t_res = 2 * tm * Hp * cdt + 2 * tm * Hp * odt
    i_res = 3 * tm * Hp * 4 + tm * 128 * 4
    need_res = w_res + t_res + i_res + (4 << 20)

    use_stream = force_stream or (need_res > budget)

    common_cost = pl.CostEstimate(
        flops=int(2 * Mp * Hp * (E * Hp + 128)),
        transcendentals=int(Mp * 128),
        bytes_accessed=int(h2.size * cdt + (E * Hp * Hp + Hp * 128) * cdt
                           + (E * Hp + 128) * 4 + Mp * Hp * odt),
    )

    if not use_stream:
        wc = jnp.concatenate(
            [jnp.transpose(we_t, (1, 0, 2)).reshape(Hp, E * Hp), wr_t], axis=1)
        bc = jnp.concatenate([be_p.reshape(1, E * Hp), br_p], axis=1)

        def _build(single_buffer):
            need = need_res + (0 if single_buffer else w_res)
            return pl.pallas_call(
                functools.partial(_moe_resident_kernel, num_experts=E),
                out_shape=jax.ShapeDtypeStruct((Mp, Hp), out_dtype),
                grid_spec=pltpu.PrefetchScalarGridSpec(
                    num_scalar_prefetch=0,
                    grid=(grid_m,),
                    in_specs=[
                        pl.BlockSpec((tm, Hp), lambda i: (i, 0)),
                        _weight_spec((Hp, E * Hp + 128), lambda i: (0, 0),
                                     single_buffer),
                        _weight_spec((1, E * Hp + 128), lambda i: (0, 0),
                                     single_buffer),
                    ],
                    out_specs=pl.BlockSpec((tm, Hp), lambda i: (i, 0)),
                ),
                compiler_params=pltpu.CompilerParams(
                    dimension_semantics=("parallel",),
                    vmem_limit_bytes=int(min(max(need, 32 << 20), budget)),
                ),
                cost_estimate=common_cost,
            )

        try:
            out = _build(True)(h2, wc, bc)
        except Exception:  # older jax without single-buffer pipeline_mode support
            out = _build(False)(h2, wc, bc)
    else:
        be3 = be_p.reshape(E, 1, Hp)
        need_strm = (2 * Hp * Hp * cdt + Hp * 128 * cdt + 2 * Hp * 4 + 512
                     + t_res + tm * Hp * 4 + tm * 128 * 4 + (4 << 20))

        def _build(single_buffer):
            return pl.pallas_call(
                functools.partial(_moe_stream_kernel, num_experts=E),
                out_shape=jax.ShapeDtypeStruct((Mp, Hp), out_dtype),
                grid_spec=pltpu.PrefetchScalarGridSpec(
                    num_scalar_prefetch=0,
                    grid=(grid_m, E),
                    in_specs=[
                        pl.BlockSpec((tm, Hp), lambda i, e: (i, 0)),
                        _weight_spec((Hp, 128), lambda i, e: (0, 0), single_buffer),
                        _weight_spec((1, 128), lambda i, e: (0, 0), single_buffer),
                        pl.BlockSpec((1, Hp, Hp), lambda i, e: (e, 0, 0)),
                        pl.BlockSpec((1, 1, Hp), lambda i, e: (e, 0, 0)),
                    ],
                    out_specs=pl.BlockSpec((tm, Hp), lambda i, e: (i, 0)),
                    scratch_shapes=[
                        pltpu.VMEM((tm, 128), jnp.float32),   # router scores
                        pltpu.VMEM((tm, Hp), jnp.float32),    # mixture accumulator
                    ],
                ),
                compiler_params=pltpu.CompilerParams(
                    dimension_semantics=("parallel", "arbitrary"),
                    vmem_limit_bytes=int(min(max(need_strm, 32 << 20), budget)),
                ),
                cost_estimate=common_cost,
            )

        try:
            out = _build(True)(h2, wr_t, br_p, we_t, be3)
        except Exception:
            out = _build(False)(h2, wr_t, br_p, we_t, be3)

    return out[:M, :H].reshape(B, S, H)


def reference_moe_head(hidden, wr, br, we, be):
    """Pure-JAX reference matching the torch forward semantics (f32)."""
    scores = jax.nn.softmax(hidden @ wr.T + br, axis=-1)                     # (B,S,E)
    expert_outs = jnp.stack(
        [hidden @ we[e].T + be[e] for e in range(we.shape[0])], axis=-1)     # (B,S,H,E)
    return jnp.sum(scores[..., None, :] * expert_outs, axis=-1)              # (B,S,H)


if __name__ == "__main__":
    # Small, deterministic config: batch=2, seq=8, hidden=32, experts=4, vocab=64.
    B, S, H, E, V = 2, 8, 32, 4, 64
    key = jax.random.PRNGKey(0)
    k_emb, k_wr, k_br, k_we, k_be, k_ids = jax.random.split(key, 6)

    # TODO(synk): GPT2 base model is not re-implemented; a token-embedding lookup
    # stands in for model(input_ids, attention_mask).last_hidden_state.
    embedding = jax.random.normal(k_emb, (V, H), dtype=jnp.float32) * 0.02
    input_ids = jax.random.randint(k_ids, (B, S), 0, V)
    attention_mask = jnp.ones((B, S), dtype=jnp.int32)    # unused by synthetic base model

    last_hidden_state = embedding[input_ids]              # (B, S, H)

    # Router / expert parameters (torch Linear convention: W is (out, in)).
    wr = jax.random.normal(k_wr, (E, H), dtype=jnp.float32) * 0.1
    br = jax.random.normal(k_br, (E,), dtype=jnp.float32) * 0.1
    we = jax.random.normal(k_we, (E, H, H), dtype=jnp.float32) * 0.1
    be = jax.random.normal(k_be, (E, H), dtype=jnp.float32) * 0.1

    # Resident-weight path (default production path).
    logits = switch_moe_head(last_hidden_state, wr, br, we, be)
    logits = jax.block_until_ready(logits)

    # Expert-streaming fallback path (used when weights exceed the VMEM budget);
    # exercised here for correctness at small shapes.
    logits_stream = switch_moe_head(last_hidden_state, wr, br, we, be,
                                    force_stream=True)
    logits_stream = jax.block_until_ready(logits_stream)

    # Reference uses the same bf16 rounding on matmul operands (f32 accumulate),
    # so the comparison stays tight despite the bf16 fast path in the kernel.
    hbf = last_hidden_state.astype(jnp.bfloat16).astype(jnp.float32)
    wrbf = wr.astype(jnp.bfloat16).astype(jnp.float32)
    webf = we.astype(jnp.bfloat16).astype(jnp.float32)
    ref = reference_moe_head(hbf, wrbf, br, webf, be)

    assert logits.shape == (B, S, H)
    for name, got in (("resident", logits), ("stream", logits_stream)):
        assert jnp.allclose(got, ref, atol=2e-3, rtol=2e-2), (
            f"{name} mismatch vs reference: max abs err = "
            f"{float(jnp.max(jnp.abs(got - ref)))}")

    # labels=None path of the torch module: loss is None, only logits returned.
    # TODO(synk): the labels CrossEntropyLoss branch is plain JAX outside the kernel.
    result = {"loss": None, "logits": logits}
    print("KERNEL_OK")
</pallas_src>

<mosaic_0001>
module attributes {stable_mosaic.version = 11 : i64} {
  func.func @_moe_resident_kernel(%arg0: i32, %arg1: memref<8x128xbf16, #tpu.memory_space<vmem>>, %arg2: memref<128x640xbf16, #tpu.memory_space<vmem>>, %arg3: memref<1x640xf32, #tpu.memory_space<vmem>>, %arg4: memref<8x128xf32, #tpu.memory_space<vmem>>) attributes {dimension_semantics = [#tpu.dimension_semantics<parallel>], iteration_bounds = array<i64: 2>, scalar_prefetch = 0 : i64, scratch_operands = 0 : i64, tpu.core_type = #tpu.core_type<tc>, window_params = [{transform_indices = @transform_0, window_bounds = array<i64: 8, 128>}, {pipeline_mode = #tpu.pipeline_mode<synchronous>, transform_indices = @transform_1, window_bounds = array<i64: 128, 640>}, {pipeline_mode = #tpu.pipeline_mode<synchronous>, transform_indices = @transform_2, window_bounds = array<i64: 1, 640>}, {transform_indices = @transform_3, window_bounds = array<i64: 8, 128>}]} {
    %c0 = arith.constant 0 : index
    %c0_0 = arith.constant 0 : index
    %0 = vector.load %arg1[%c0, %c0_0] : memref<8x128xbf16, #tpu.memory_space<vmem>>, vector<8x128xbf16>
    %c0_1 = arith.constant 0 : index
    %c512 = arith.constant 512 : index
    %1 = vector.load %arg2[%c0_1, %c512] : memref<128x640xbf16, #tpu.memory_space<vmem>>, vector<128x128xbf16>
    %cst = arith.constant dense<0.000000e+00> : vector<8x128xf32>
    %2 = tpu.matmul %0, %1, %cst {dimension_numbers = #tpu.dot_dimension_numbers<[1], [0], [0], [1], [0, 0, 1, 1], [], []>} : vector<8x128xbf16>, vector<128x128xbf16>, vector<8x128xf32> -> vector<8x128xf32>
    %c0_2 = arith.constant 0 : index
    %c512_3 = arith.constant 512 : index
    %3 = vector.load %arg3[%c0_2, %c512_3] : memref<1x640xf32, #tpu.memory_space<vmem>>, vector<1x128xf32>
    %4 = vector.broadcast %3 : vector<1x128xf32> to vector<8x128xf32>
    %5 = arith.addf %2, %4 : vector<8x128xf32>
    %6 = tpu.iota {dimensions = array<i32: 1>} : vector<8x128xi32>
    %c4_i32 = arith.constant 4 : i32
    %7 = vector.broadcast %c4_i32 : i32 to vector<8x128xi32>
    %8 = arith.cmpi slt, %6, %7 : vector<8x128xi32>
    %cst_4 = arith.constant 0xFF800000 : f32
    %9 = vector.broadcast %cst_4 : f32 to vector<8x128xf32>
    %10 = arith.select %8, %5, %9 : vector<8x128xi1>, vector<8x128xf32>
    %cst_5 = arith.constant dense<0xFF800000> : vector<8xf32>
    %11 = vector.multi_reduction <maximumf>, %10, %cst_5 [1] : vector<8x128xf32> to vector<8xf32>
    %12 = vector.shape_cast %11 : vector<8xf32> to vector<8x1xf32>
    %13 = vector.broadcast %12 : vector<8x1xf32> to vector<8x128xf32>
    %14 = arith.subf %10, %13 : vector<8x128xf32>
    %15 = math.exp %14 : vector<8x128xf32>
    %cst_6 = arith.constant dense<0.000000e+00> : vector<8xf32>
    %16 = vector.multi_reduction <add>, %15, %cst_6 [1] : vector<8x128xf32> to vector<8xf32>
    %17 = vector.shape_cast %16 : vector<8xf32> to vector<8x1xf32>
    %18 = tpu.reciprocal %17 {approx = true} : vector<8x1xf32> -> vector<8x1xf32>
    %19 = vector.broadcast %18 : vector<8x1xf32> to vector<8x128xf32>
    %20 = arith.mulf %15, %19 : vector<8x128xf32>
    %c0_7 = arith.constant 0 : index
    %c0_8 = arith.constant 0 : index
    %21 = vector.load %arg2[%c0_7, %c0_8] : memref<128x640xbf16, #tpu.memory_space<vmem>>, vector<128x128xbf16>
    %cst_9 = arith.constant dense<0.000000e+00> : vector<8x128xf32>
    %22 = tpu.matmul %0, %21, %cst_9 {dimension_numbers = #tpu.dot_dimension_numbers<[1], [0], [0], [1], [0, 0, 1, 1], [], []>} : vector<8x128xbf16>, vector<128x128xbf16>, vector<8x128xf32> -> vector<8x128xf32>
    %c0_10 = arith.constant 0 : index
    %c0_11 = arith.constant 0 : index
    %23 = vector.load %arg3[%c0_10, %c0_11] : memref<1x640xf32, #tpu.memory_space<vmem>>, vector<1x128xf32>
    %24 = vector.broadcast %23 : vector<1x128xf32> to vector<8x128xf32>
    %25 = arith.addf %22, %24 : vector<8x128xf32>
    %26 = vector.extract_strided_slice %20 {offsets = [0, 0], sizes = [8, 1], strides = [1, 1]} : vector<8x128xf32> to vector<8x1xf32>
    %27 = vector.broadcast %26 : vector<8x1xf32> to vector<8x128xf32>
    %28 = arith.mulf %27, %25 : vector<8x128xf32>
    %c0_12 = arith.constant 0 : index
    %c128 = arith.constant 128 : index
    %29 = vector.load %arg2[%c0_12, %c128] : memref<128x640xbf16, #tpu.memory_space<vmem>>, vector<128x128xbf16>
    %cst_13 = arith.constant dense<0.000000e+00> : vector<8x128xf32>
    %30 = tpu.matmul %0, %29, %cst_13 {dimension_numbers = #tpu.dot_dimension_numbers<[1], [0], [0], [1], [0, 0, 1, 1], [], []>} : vector<8x128xbf16>, vector<128x128xbf16>, vector<8x128xf32> -> vector<8x128xf32>
    %c0_14 = arith.constant 0 : index
    %c128_15 = arith.constant 128 : index
    %31 = vector.load %arg3[%c0_14, %c128_15] : memref<1x640xf32, #tpu.memory_space<vmem>>, vector<1x128xf32>
    %32 = vector.broadcast %31 : vector<1x128xf32> to vector<8x128xf32>
    %33 = arith.addf %30, %32 : vector<8x128xf32>
    %34 = vector.extract_strided_slice %20 {offsets = [0, 1], sizes = [8, 1], strides = [1, 1]} : vector<8x128xf32> to vector<8x1xf32>
    %35 = vector.broadcast %34 : vector<8x1xf32> to vector<8x128xf32>
    %36 = arith.mulf %35, %33 : vector<8x128xf32>
    %37 = arith.addf %28, %36 : vector<8x128xf32>
    %c0_16 = arith.constant 0 : index
    %c256 = arith.constant 256 : index
    %38 = vector.load %arg2[%c0_16, %c256] : memref<128x640xbf16, #tpu.memory_space<vmem>>, vector<128x128xbf16>
    %cst_17 = arith.constant dense<0.000000e+00> : vector<8x128xf32>
    %39 = tpu.matmul %0, %38, %cst_17 {dimension_numbers = #tpu.dot_dimension_numbers<[1], [0], [0], [1], [0, 0, 1, 1], [], []>} : vector<8x128xbf16>, vector<128x128xbf16>, vector<8x128xf32> -> vector<8x128xf32>
    %c0_18 = arith.constant 0 : index
    %c256_19 = arith.constant 256 : index
    %40 = vector.load %arg3[%c0_18, %c256_19] : memref<1x640xf32, #tpu.memory_space<vmem>>, vector<1x128xf32>
    %41 = vector.broadcast %40 : vector<1x128xf32> to vector<8x128xf32>
    %42 = arith.addf %39, %41 : vector<8x128xf32>
    %43 = vector.extract_strided_slice %20 {offsets = [0, 2], sizes = [8, 1], strides = [1, 1]} : vector<8x128xf32> to vector<8x1xf32>
    %44 = vector.broadcast %43 : vector<8x1xf32> to vector<8x128xf32>
    %45 = arith.mulf %44, %42 : vector<8x128xf32>
    %46 = arith.addf %37, %45 : vector<8x128xf32>
    %c0_20 = arith.constant 0 : index
    %c384 = arith.constant 384 : index
    %47 = vector.load %arg2[%c0_20, %c384] : memref<128x640xbf16, #tpu.memory_space<vmem>>, vector<128x128xbf16>
    %cst_21 = arith.constant dense<0.000000e+00> : vector<8x128xf32>
    %48 = tpu.matmul %0, %47, %cst_21 {dimension_numbers = #tpu.dot_dimension_numbers<[1], [0], [0], [1], [0, 0, 1, 1], [], []>} : vector<8x128xbf16>, vector<128x128xbf16>, vector<8x128xf32> -> vector<8x128xf32>
    %c0_22 = arith.constant 0 : index
    %c384_23 = arith.constant 384 : index
    %49 = vector.load %arg3[%c0_22, %c384_23] : memref<1x640xf32, #tpu.memory_space<vmem>>, vector<1x128xf32>
    %50 = vector.broadcast %49 : vector<1x128xf32> to vector<8x128xf32>
    %51 = arith.addf %48, %50 : vector<8x128xf32>
    %52 = vector.extract_strided_slice %20 {offsets = [0, 3], sizes = [8, 1], strides = [1, 1]} : vector<8x128xf32> to vector<8x1xf32>
    %53 = vector.broadcast %52 : vector<8x1xf32> to vector<8x128xf32>
    %54 = arith.mulf %53, %51 : vector<8x128xf32>
    %55 = arith.addf %46, %54 : vector<8x128xf32>
    %c0_24 = arith.constant 0 : index
    %c0_25 = arith.constant 0 : index
    %56 = vector.load %arg4[%c0_24, %c0_25] : memref<8x128xf32, #tpu.memory_space<vmem>>, vector<8x128xf32>
    tpu.vector_store %arg4[%c0_24, %c0_25], %55 {strides = array<i32>} : memref<8x128xf32, #tpu.memory_space<vmem>>, vector<8x128xf32>,
    return
  }
  func.func @transform_0(%arg0: i32) -> (i32, i32) {
    %c0_i32 = arith.constant 0 : i32
    %c0_i32_0 = arith.constant 0 : i32
    return %arg0, %c0_i32 : i32, i32
  }
  func.func @transform_1(%arg0: i32) -> (i32, i32) {
    %c0_i32 = arith.constant 0 : i32
    %c0_i32_0 = arith.constant 0 : i32
    %c0_i32_1 = arith.constant 0 : i32
    return %c0_i32, %c0_i32_0 : i32, i32
  }
  func.func @transform_2(%arg0: i32) -> (i32, i32) {
    %c0_i32 = arith.constant 0 : i32
    %c0_i32_0 = arith.constant 0 : i32
    %c0_i32_1 = arith.constant 0 : i32
    return %c0_i32, %c0_i32_0 : i32, i32
  }
  func.func @transform_3(%arg0: i32) -> (i32, i32) {
    %c0_i32 = arith.constant 0 : i32
    %c0_i32_0 = arith.constant 0 : i32
    return %arg0, %c0_i32 : i32, i32
  }
}

module attributes {stable_mosaic.version = 11 : i64} {
  func.func @_moe_resident_kernel(%arg0: i32, %arg1: memref<8x128xbf16, #tpu.memory_space<vmem>>, %arg2: memref<128x640xbf16, #tpu.memory_space<vmem>>, %arg3: memref<1x640xf32, #tpu.memory_space<vmem>>, %arg4: memref<8x128xf32, #tpu.memory_space<vmem>>) attributes {dimension_semantics = [#tpu.dimension_semantics<parallel>], iteration_bounds = array<i64: 2>, scalar_prefetch = 0 : i64, scratch_operands = 0 : i64, tpu.core_type = #tpu.core_type<tc>, window_params = [{transform_indices = @transform_0, window_bounds = array<i64: 8, 128>}, {pipeline_mode = #tpu.pipeline_mode<synchronous>, transform_indices = @transform_1, window_bounds = array<i64: 128, 640>}, {pipeline_mode = #tpu.pipeline_mode<synchronous>, transform_indices = @transform_2, window_bounds = array<i64: 1, 640>}, {transform_indices = @transform_3, window_bounds = array<i64: 8, 128>}]} {
    %c0 = arith.constant 0 : index
    %c0_0 = arith.constant 0 : index
    %0 = vector.load %arg1[%c0, %c0_0] : memref<8x128xbf16, #tpu.memory_space<vmem>>, vector<8x128xbf16>
    %c0_1 = arith.constant 0 : index
    %c512 = arith.constant 512 : index
    %1 = vector.load %arg2[%c0_1, %c512] : memref<128x640xbf16, #tpu.memory_space<vmem>>, vector<128x128xbf16>
    %cst = arith.constant dense<0.000000e+00> : vector<8x128xf32>
    %2 = tpu.matmul %0, %1, %cst {dimension_numbers = #tpu.dot_dimension_numbers<[1], [0], [0], [1], [0, 0, 1, 1], [], []>} : vector<8x128xbf16>, vector<128x128xbf16>, vector<8x128xf32> -> vector<8x128xf32>
    %c0_2 = arith.constant 0 : index
    %c512_3 = arith.constant 512 : index
    %3 = vector.load %arg3[%c0_2, %c512_3] : memref<1x640xf32, #tpu.memory_space<vmem>>, vector<1x128xf32>
    %4 = vector.broadcast %3 : vector<1x128xf32> to vector<8x128xf32>
    %5 = arith.addf %2, %4 : vector<8x128xf32>
    %6 = tpu.iota {dimensions = array<i32: 1>} : vector<8x128xi32>
    %c4_i32 = arith.constant 4 : i32
    %7 = vector.broadcast %c4_i32 : i32 to vector<8x128xi32>
    %8 = arith.cmpi slt, %6, %7 : vector<8x128xi32>
    %cst_4 = arith.constant 0xFF800000 : f32
    %9 = vector.broadcast %cst_4 : f32 to vector<8x128xf32>
    %10 = arith.select %8, %5, %9 : vector<8x128xi1>, vector<8x128xf32>
    %cst_5 = arith.constant dense<0xFF800000> : vector<8xf32>
    %11 = vector.multi_reduction <maximumf>, %10, %cst_5 [1] : vector<8x128xf32> to vector<8xf32>
    %12 = vector.shape_cast %11 : vector<8xf32> to vector<8x1xf32>
    %13 = vector.broadcast %12 : vector<8x1xf32> to vector<8x128xf32>
    %14 = arith.subf %10, %13 : vector<8x128xf32>
    %15 = math.exp %14 : vector<8x128xf32>
    %cst_6 = arith.constant dense<0.000000e+00> : vector<8xf32>
    %16 = vector.multi_reduction <add>, %15, %cst_6 [1] : vector<8x128xf32> to vector<8xf32>
    %17 = vector.shape_cast %16 : vector<8xf32> to vector<8x1xf32>
    %18 = tpu.reciprocal %17 {approx = true} : vector<8x1xf32> -> vector<8x1xf32>
    %19 = vector.broadcast %18 : vector<8x1xf32> to vector<8x128xf32>
    %20 = arith.mulf %15, %19 : vector<8x128xf32>
    %c0_7 = arith.constant 0 : index
    %c0_8 = arith.constant 0 : index
    %21 = vector.load %arg2[%c0_7, %c0_8] : memref<128x640xbf16, #tpu.memory_space<vmem>>, vector<128x128xbf16>
    %cst_9 = arith.constant dense<0.000000e+00> : vector<8x128xf32>
    %22 = tpu.matmul %0, %21, %cst_9 {dimension_numbers = #tpu.dot_dimension_numbers<[1], [0], [0], [1], [0, 0, 1, 1], [], []>} : vector<8x128xbf16>, vector<128x128xbf16>, vector<8x128xf32> -> vector<8x128xf32>
    %c0_10 = arith.constant 0 : index
    %c0_11 = arith.constant 0 : index
    %23 = vector.load %arg3[%c0_10, %c0_11] : memref<1x640xf32, #tpu.memory_space<vmem>>, vector<1x128xf32>
    %24 = vector.broadcast %23 : vector<1x128xf32> to vector<8x128xf32>
    %25 = arith.addf %22, %24 : vector<8x128xf32>
    %26 = vector.extract_strided_slice %20 {offsets = [0, 0], sizes = [8, 1], strides = [1, 1]} : vector<8x128xf32> to vector<8x1xf32>
    %27 = vector.broadcast %26 : vector<8x1xf32> to vector<8x128xf32>
    %28 = arith.mulf %27, %25 : vector<8x128xf32>
    %c0_12 = arith.constant 0 : index
    %c128 = arith.constant 128 : index
    %29 = vector.load %arg2[%c0_12, %c128] : memref<128x640xbf16, #tpu.memory_space<vmem>>, vector<128x128xbf16>
    %cst_13 = arith.constant dense<0.000000e+00> : vector<8x128xf32>
    %30 = tpu.matmul %0, %29, %cst_13 {dimension_numbers = #tpu.dot_dimension_numbers<[1], [0], [0], [1], [0, 0, 1, 1], [], []>} : vector<8x128xbf16>, vector<128x128xbf16>, vector<8x128xf32> -> vector<8x128xf32>
    %c0_14 = arith.constant 0 : index
    %c128_15 = arith.constant 128 : index
    %31 = vector.load %arg3[%c0_14, %c128_15] : memref<1x640xf32, #tpu.memory_space<vmem>>, vector<1x128xf32>
    %32 = vector.broadcast %31 : vector<1x128xf32> to vector<8x128xf32>
    %33 = arith.addf %30, %32 : vector<8x128xf32>
    %34 = vector.extract_strided_slice %20 {offsets = [0, 1], sizes = [8, 1], strides = [1, 1]} : vector<8x128xf32> to vector<8x1xf32>
    %35 = vector.broadcast %34 : vector<8x1xf32> to vector<8x128xf32>
    %36 = arith.mulf %35, %33 : vector<8x128xf32>
    %37 = arith.addf %28, %36 : vector<8x128xf32>
    %c0_16 = arith.constant 0 : index
    %c256 = arith.constant 256 : index
    %38 = vector.load %arg2[%c0_16, %c256] : memref<128x640xbf16, #tpu.memory_space<vmem>>, vector<128x128xbf16>
    %cst_17 = arith.constant dense<0.000000e+00> : vector<8x128xf32>
    %39 = tpu.matmul %0, %38, %cst_17 {dimension_numbers = #tpu.dot_dimension_numbers<[1], [0], [0], [1], [0, 0, 1, 1], [], []>} : vector<8x128xbf16>, vector<128x128xbf16>, vector<8x128xf32> -> vector<8x128xf32>
    %c0_18 = arith.constant 0 : index
    %c256_19 = arith.constant 256 : index
    %40 = vector.load %arg3[%c0_18, %c256_19] : memref<1x640xf32, #tpu.memory_space<vmem>>, vector<1x128xf32>
    %41 = vector.broadcast %40 : vector<1x128xf32> to vector<8x128xf32>
    %42 = arith.addf %39, %41 : vector<8x128xf32>
    %43 = vector.extract_strided_slice %20 {offsets = [0, 2], sizes = [8, 1], strides = [1, 1]} : vector<8x128xf32> to vector<8x1xf32>
    %44 = vector.broadcast %43 : vector<8x1xf32> to vector<8x128xf32>
    %45 = arith.mulf %44, %42 : vector<8x128xf32>
    %46 = arith.addf %37, %45 : vector<8x128xf32>
    %c0_20 = arith.constant 0 : index
    %c384 = arith.constant 384 : index
    %47 = vector.load %arg2[%c0_20, %c384] : memref<128x640xbf16, #tpu.memory_space<vmem>>, vector<128x128xbf16>
    %cst_21 = arith.constant dense<0.000000e+00> : vector<8x128xf32>
    %48 = tpu.matmul %0, %47, %cst_21 {dimension_numbers = #tpu.dot_dimension_numbers<[1], [0], [0], [1], [0, 0, 1, 1], [], []>} : vector<8x128xbf16>, vector<128x128xbf16>, vector<8x128xf32> -> vector<8x128xf32>
    %c0_22 = arith.constant 0 : index
    %c384_23 = arith.constant 384 : index
    %49 = vector.load %arg3[%c0_22, %c384_23] : memref<1x640xf32, #tpu.memory_space<vmem>>, vector<1x128xf32>
    %50 = vector.broadcast %49 : vector<1x128xf32> to vector<8x128xf32>
    %51 = arith.addf %48, %50 : vector<8x128xf32>
    %52 = vector.extract_strided_slice %20 {offsets = [0, 3], sizes = [8, 1], strides = [1, 1]} : vector<8x128xf32> to vector<8x1xf32>
    %53 = vector.broadcast %52 : vector<8x1xf32> to vector<8x128xf32>
    %54 = arith.mulf %53, %51 : vector<8x128xf32>
    %55 = arith.addf %46, %54 : vector<8x128xf32>
    %c0_24 = arith.constant 0 : index
    %c0_25 = arith.constant 0 : index
    %56 = vector.load %arg4[%c0_24, %c0_25] : memref<8x128xf32, #tpu.memory_space<vmem>>, vector<8x128xf32>
    tpu.vector_store %arg4[%c0_24, %c0_25], %55 {strides = array<i32>} : memref<8x128xf32, #tpu.memory_space<vmem>>, vector<8x128xf32>,
    return
  }
  func.func @transform_0(%arg0: i32) -> (i32, i32) {
    %c0_i32 = arith.constant 0 : i32
    %c0_i32_0 = arith.constant 0 : i32
    return %arg0, %c0_i32 : i32, i32
  }
  func.func @transform_1(%arg0: i32) -> (i32, i32) {
    %c0_i32 = arith.constant 0 : i32
    %c0_i32_0 = arith.constant 0 : i32
    %c0_i32_1 = arith.constant 0 : i32
    return %c0_i32, %c0_i32_0 : i32, i32
  }
  func.func @transform_2(%arg0: i32) -> (i32, i32) {
    %c0_i32 = arith.constant 0 : i32
    %c0_i32_0 = arith.constant 0 : i32
    %c0_i32_1 = arith.constant 0 : i32
    return %c0_i32, %c0_i32_0 : i32, i32
  }
  func.func @transform_3(%arg0: i32) -> (i32, i32) {
    %c0_i32 = arith.constant 0 : i32
    %c0_i32_0 = arith.constant 0 : i32
    return %arg0, %c0_i32 : i32, i32
  }
}

</mosaic_0001>

<llo_original>
// kernel: tpu_custom_call.1
$region0: #{tpu_custom_call.1}
  #allocation0 [shape = 'u32[]', space=smem, size = 0x4, offset = 0x4, fixed_abs, tag = 'smem constant byte address 0x4 - core index']
  #allocation1 [shape = 'u32[144,128]{1,0:T(1,128)}', space=vmem, size = 0x12000, scoped, tag = 'internal scratch']
  %s0 = inlined_call_operand.hbm [shape: bf16[16,128], index: 0, kind: input, shape index: {}]
  %s1 = inlined_call_operand.hbm [shape: bf16[128,640], index: 1, kind: input, shape index: {}]
  %s2 = inlined_call_operand.vmem [shape: f32[1,640], index: 2, kind: input, shape index: {}]
  %s3 = inlined_call_operand.hbm [shape: f32[16,128], index: 3, kind: output, shape index: {}]
  %s4 = sld [smem:[#allocation0]]
  $region53: #{tpu_custom_call.1} parent=0
    _
  %s6 = ssub.s32 1, %s4
  %s7 = scalar_select 0, %s6, %s4
  $region1: #{tpu_custom_call.1} parent=0
    #allocation2 [shape = 'u8[4096]{0}', space=vmem, size = 0x1000, scoped, tag = 'input window, operand 0']
    #allocation3 [shape = 's32[2]{0}', space=sflag, size = 0x8, scoped, tag = 'scoped memory for tpu_custom_call.1']
    #allocation4 [shape = 's32[2]{0}', space=sflag, size = 0x8, scoped, tag = 'scoped memory for tpu_custom_call.1']
    #allocation5 [shape = 'u8[163840]{0}', space=vmem, size = 0x28000, scoped, tag = 'input window, operand 1, single buffered']
    #allocation6 [shape = 's32[1]{0}', space=sflag, size = 0x4, scoped, tag = 'scoped memory for tpu_custom_call.1']
    #allocation7 [shape = 'u8[8192]{0}', space=vmem, size = 0x2000, scoped, tag = 'output window, operand 0']
    %8 = vsyncpa [#allocation3], 0
    %s9 = scalar_lea.sflag [#allocation3], 1
    %10 = vsyncpa %s9, 0
    %11 = vsyncpa [#allocation6], 0
    %12 = vsyncpa [#allocation4], 0
    %s13 = scalar_lea.sflag [#allocation4], 1
    %14 = vsyncpa %s13, 0
    loop: start=0, step=1, limit=4
    $region2: #{tpu_custom_call.1} parent=1 // loop_pre_header
      _
    $region3: #{tpu_custom_call.1} parent=1 // loop_header
      %s16 = sphi 0, %s20
      %p17 = scmp.ge.s32.totalorder %s16, 4
      %s26 = sphi 0, %s28
      %s29 = sphi 0, %s26
      %s30 = sphi 0, %s29
      %s46 = sphi 0, %s30
      %s50 = sphi 0, %s50
      %s52 = sphi 0, %s50
      %s53 = sphi 0, %s52
      %s67 = sphi 0, %s53
      %s71 = sphi 0, %s71
      %s73 = sphi 0, %s71
      %s74 = sphi 0, %s73
      %s88 = sphi 0, %s74
      %s94 = sphi 0, %s96
      %s97 = sphi 0, %s94
      %s98 = sphi 0, %s97
      %s114 = sphi 0, %s98
    $region4: #{tpu_custom_call.1} parent=1 // loop_header_branch
      %19 = sbr.rel (%p17) target = $region8
    $region5: #{tpu_custom_call.1} parent=1 // loop_body
      %s21 = ssub.s32 %s16, 1
      %s22 = ssub.s32 %s16, 2
      %s23 = sadd.s32 %s16, 1
      %s24 = ssub.s32 %s16, %s23
      %p25 = scmp.eq.s32.totalorder %s24, 0
      %s27 = sadd.s32 %s26, 1
      %s28 = scalar_select %p25, %s26, %s27
      %p31 = pneg %p25
      %p32 = scmp.eq.s32.totalorder %s16, 1
      %p33 = por %p31, %p32
      %p34 = scmp.ne.s32.totalorder %s26, %s29
      %p35 = scmp.eq.s32.totalorder %s16, 0
      %p36 = por %p34, %p35
      %p37 = scmp.ne.s32.totalorder %s26, %s29
      %p38 = scmp.eq.s32.totalorder %s21, 1
      %p39 = por %p37, %p38
      %p40 = scmp.ne.s32.totalorder %s29, %s30
      %p41 = scmp.eq.s32.totalorder %s21, 0
      %p42 = por %p40, %p41
      %p43 = scmp.ne.s32.totalorder %s29, %s30
      %p44 = scmp.eq.s32.totalorder %s22, 1
      %p45 = por %p43, %p44
      %p47 = scmp.ne.s32.totalorder %s30, %s46
      %p48 = scmp.eq.s32.totalorder %s22, 0
      %p49 = por %p47, %p48
      %s51 = sadd.s32 %s50, 1
      %p54 = scmp.eq.s32.totalorder %s16, 1
      %p55 = scmp.ne.s32.totalorder %s50, %s52
      %p56 = scmp.eq.s32.totalorder %s16, 0
      %p57 = por %p55, %p56
      %p58 = scmp.ne.s32.totalorder %s50, %s52
      %p59 = scmp.eq.s32.totalorder %s21, 1
      %p60 = por %p58, %p59
      %p61 = scmp.ne.s32.totalorder %s52, %s53
      %p62 = scmp.eq.s32.totalorder %s21, 0
      %p63 = por %p61, %p62
      %p64 = scmp.ne.s32.totalorder %s52, %s53
      %p65 = scmp.eq.s32.totalorder %s22, 1
      %p66 = por %p64, %p65
      %p68 = scmp.ne.s32.totalorder %s53, %s67
      %p69 = scmp.eq.s32.totalorder %s22, 0
      %p70 = por %p68, %p69
      %s72 = sadd.s32 %s71, 1
      %p75 = scmp.eq.s32.totalorder %s16, 1
      %p76 = scmp.ne.s32.totalorder %s71, %s73
      %p77 = scmp.eq.s32.totalorder %s16, 0
      %p78 = por %p76, %p77
      %p79 = scmp.ne.s32.totalorder %s71, %s73
      %p80 = scmp.eq.s32.totalorder %s21, 1
      %p81 = por %p79, %p80
      %p82 = scmp.ne.s32.totalorder %s73, %s74
      %p83 = scmp.eq.s32.totalorder %s21, 0
      %p84 = por %p82, %p83
      %p85 = scmp.ne.s32.totalorder %s73, %s74
      %p86 = scmp.eq.s32.totalorder %s22, 1
      %p87 = por %p85, %p86
      %p89 = scmp.ne.s32.totalorder %s74, %s88
      %p90 = scmp.eq.s32.totalorder %s22, 0
      %p91 = por %p89, %p90
      %s92 = ssub.s32 %s16, %s23
      %p93 = scmp.eq.s32.totalorder %s92, 0
      %s95 = sadd.s32 %s94, 1
      %s96 = scalar_select %p93, %s94, %s95
      %p99 = pneg %p93
      %p100 = scmp.eq.s32.totalorder %s16, 1
      %p101 = por %p99, %p100
      %p102 = scmp.ne.s32.totalorder %s94, %s97
      %p103 = scmp.eq.s32.totalorder %s16, 0
      %p104 = por %p102, %p103
      %p105 = scmp.ne.s32.totalorder %s94, %s97
      %p106 = scmp.eq.s32.totalorder %s21, 1
      %p107 = por %p105, %p106
      %p108 = scmp.ne.s32.totalorder %s97, %s98
      %p109 = scmp.eq.s32.totalorder %s21, 0
      %p110 = por %p108, %p109
      %p111 = scmp.ne.s32.totalorder %s97, %s98
      %p112 = scmp.eq.s32.totalorder %s22, 1
      %p113 = por %p111, %p112
      %p115 = scmp.ne.s32.totalorder %s98, %s114
      %p116 = scmp.eq.s32.totalorder %s22, 0
      %p117 = por %p115, %p116
      %p118 = scmp.le.s32.totalorder 1, %s16
      %p119 = scmp.lt.s32.totalorder %s16, 3
      %p120 = pnand %p118, %p119
      %p121 = pneg %p120
      // Predicated region
      $region9: #{tpu_custom_call.1} parent=5 // pred_check
        _
      $region10: #{tpu_custom_call.1} parent=5 // pred_check_branch
        %123 = sbr.rel (%p120) target = $region12
      $region11: #{tpu_custom_call.1} parent=5 // pred_region
        %s124 = ssub.s32 %s16, 1
        // Predicated region
        $region13: #{tpu_custom_call.1} parent=11 // pred_check
          %p125 = pneg %p63
        $region14: #{tpu_custom_call.1} parent=11 // pred_check_branch
          %127 = sbr.rel (%p125) target = $region16
        $region15: #{tpu_custom_call.1} parent=11 // pred_region
          %s129 = ssub.s32 5120, 5120
          %130 = vsyncadd [#allocation6], %s129
          %s131 = sshll.u32 [#allocation5], 4
          %s132 = int_to_ptr.vmem [resolvable:$true] %s131
          %137 = dma.hbm_to_vmem [thread:$0]  %s1, 5120, %s132, [#allocation6], 320, 320, 20
        $region16: #{tpu_custom_call.1} parent=11 // pred_fallthru
          _
        // Predicated region
        $region17: #{tpu_custom_call.1} parent=11 // pred_check
          %p138 = pneg %p84
        $region18: #{tpu_custom_call.1} parent=11 // pred_check_branch
          %140 = sbr.rel (%p138) target = $region20
        $region19: #{tpu_custom_call.1} parent=11 // pred_region
          _
        $region20: #{tpu_custom_call.1} parent=11 // pred_fallthru
          _
      $region12: #{tpu_custom_call.1} parent=5 // pred_fallthru
        _
      %p141 = scmp.lt.s32.totalorder %s16, 2
      // Predicated region
      $region21: #{tpu_custom_call.1} parent=5 // pred_check
        %p142 = pneg %p141
      $region22: #{tpu_custom_call.1} parent=5 // pred_check_branch
        %144 = sbr.rel (%p142) target = $region24
      $region23: #{tpu_custom_call.1} parent=5 // pred_region
        // Predicated region
        $region25: #{tpu_custom_call.1} parent=23 // pred_check
          %p145 = pneg %p36
        $region26: #{tpu_custom_call.1} parent=23 // pred_check_branch
          %147 = sbr.rel (%p145) target = $region28
        $region27: #{tpu_custom_call.1} parent=23 // pred_region
          %s148 = sand.u32 %s26, 1
          %s149 = scalar_lea.sflag [#allocation3], %s148
          %s150 = sand.u32 %s26, 1
          %s151 = smul.addr %s150, 4
          %s152 = scalar_lea.vmem [#allocation2], %s151
          %s154 = ssub.s32 64, 64
          %155 = vsyncadd %s149, %s154
          %s156 = smul.addr %s16, 64
          %s157 = scalar_lea.hbm %s0, %s156
          %s159 = sshll.u32 %s152, 4
          %s160 = int_to_ptr.vmem [resolvable:$true] %s159
          %162 = dma.hbm_to_vmem [thread:$0]  %s157, 64, %s160, %s149
        $region28: #{tpu_custom_call.1} parent=23 // pred_fallthru
          _
      $region24: #{tpu_custom_call.1} parent=5 // pred_fallthru
        _
      %p163 = scmp.le.s32.totalorder 1, %s16
      %p164 = scmp.lt.s32.totalorder %s16, 3
      %p165 = pnand %p163, %p164
      %p166 = pneg %p165
      // Predicated region
      $region29: #{tpu_custom_call.1} parent=5 // pred_check
        _
      $region30: #{tpu_custom_call.1} parent=5 // pred_check_branch
        %168 = sbr.rel (%p165) target = $region32
      $region31: #{tpu_custom_call.1} parent=5 // pred_region
        %s169 = ssub.s32 %s16, 1
        %s170 = sand.u32 %s29, 1
        %s171 = scalar_lea.sflag [#allocation3], %s170
        %s172 = sand.u32 %s29, 1
        %s173 = smul.addr %s172, 4
        %s174 = scalar_lea.vmem [#allocation2], %s173
        // Predicated region
        $region33: #{tpu_custom_call.1} parent=31 // pred_check
          %p175 = pneg %p42
        $region34: #{tpu_custom_call.1} parent=31 // pred_check_branch
          %177 = sbr.rel (%p175) target = $region36
        $region35: #{tpu_custom_call.1} parent=31 // pred_region
          %178 = dma.done %s171, 64
        $region36: #{tpu_custom_call.1} parent=31 // pred_fallthru
          _
        // Predicated region
        $region37: #{tpu_custom_call.1} parent=31 // pred_check
          %p179 = pneg %p63
        $region38: #{tpu_custom_call.1} parent=31 // pred_check_branch
          %181 = sbr.rel (%p179) target = $region40
        $region39: #{tpu_custom_call.1} parent=31 // pred_region
          %182 = dma.done [#allocation6], 5120
        $region40: #{tpu_custom_call.1} parent=31 // pred_fallthru
          _
        %s183 = sand.u32 %s29, 1
        %s184 = scalar_lea.sflag [#allocation3], %s183
        %s185 = sand.u32 %s29, 1
        %s186 = smul.addr %s185, 4
        %s187 = scalar_lea.vmem [#allocation2], %s186
        %p188 = pneg %p42
        %p189 = pneg %p39
        %p190 = pneg %p63
        %p191 = pneg %p60
        %p192 = pneg %p84
        %p193 = pneg %p81
        %p194 = pneg %p110
        %p195 = pneg %p107
        %s196 = sand.u32 %s97, 1
        %s197 = scalar_lea.sflag [#allocation4], %s196
        %s198 = sand.u32 %s97, 1
        %s199 = smul.addr %s198, 8
        %s200 = scalar_lea.vmem [#allocation7], %s199
        %v202 = vld [vmem:[%s174] sm:$0xf]
        %v203 = vld [vmem:[#allocation5 + $0x10] sm:$0xf]
        %v204 = vld [vmem:[#allocation5 + $0x24] sm:$0xf]
        %v205 = vld [vmem:[#allocation5 + $0x38] sm:$0xf]
        %v206 = vld [vmem:[#allocation5 + $0x4c] sm:$0xf]
        %v207 = vld [vmem:[#allocation5 + $0x60] sm:$0xf]
        %v208 = vld [vmem:[#allocation5 + $0x74] sm:$0xf]
        %v209 = vld [vmem:[#allocation5 + $0x88] sm:$0xf]
        %v210 = vld [vmem:[#allocation5 + $0x9c] sm:$0xf]
        %v211 = vld [vmem:[#allocation5 + $0xb0] sm:$0xf]
        %v212 = vld [vmem:[#allocation5 + $0xc4] sm:$0xf]
        %v213 = vld [vmem:[#allocation5 + $0xd8] sm:$0xf]
        %v214 = vld [vmem:[#allocation5 + $0xec] sm:$0xf]
        %v215 = vld [vmem:[#allocation5 + $0x100] sm:$0xf]
        %v216 = vld [vmem:[#allocation5 + $0x114] sm:$0xf]
        %v217 = vld [vmem:[#allocation5 + $0x128] sm:$0xf]
        %v218 = vld [vmem:[#allocation5 + $0x13c] sm:$0xf]
        %v219 = vld [vmem:[%s2 + $0x4] sm:$0x1]
        %v221 = vlaneseq
        %v222 = vshrl.u32 %v221, 7
        %v223 = vsub.s32 0, %v222
        %v224 = vrot.slane %v219, %v223
        %v242 = vunpack.c.l.b16 %v203
        %v243 = vunpack.c.l.b16 %v204
        %v244 = vunpack.c.l.b16 %v205
        %v245 = vunpack.c.l.b16 %v206
        %v246 = vunpack.c.l.b16 %v207
        %v247 = vunpack.c.l.b16 %v208
        %v248 = vunpack.c.l.b16 %v209
        %v249 = vunpack.c.l.b16 %v210
        %v250 = vunpack.c.l.b16 %v211
        %v251 = vunpack.c.l.b16 %v212
        %v252 = vunpack.c.l.b16 %v213
        %v253 = vunpack.c.l.b16 %v214
        %v254 = vunpack.c.l.b16 %v215
        %v255 = vunpack.c.l.b16 %v216
        %v256 = vunpack.c.l.b16 %v217
        %v257 = vunpack.c.l.b16 %v218
        %v258 = vpack.c.b16 %v243, %v242
        %v259 = vpack.c.b16 %v245, %v244
        %v260 = vpack.c.b16 %v247, %v246
        %v261 = vpack.c.b16 %v249, %v248
        %v262 = vpack.c.b16 %v251, %v250
        %v263 = vpack.c.b16 %v253, %v252
        %v264 = vpack.c.b16 %v255, %v254
        %v265 = vpack.c.b16 %v257, %v256
        %274 = vmatprep.subr.bf16.mxu0 0
        %275 = vmatpush1.bf16.msra.mxu0 %v258
        %276 = vmatprep.subr.bf16.mxu0 0
        %277 = vmatpush1.bf16.msra.mxu0 %v259
        %278 = vmatprep.subr.bf16.mxu0 0
        %279 = vmatpush1.bf16.msra.mxu0 %v260
        %280 = vmatprep.subr.bf16.mxu0 0
        %281 = vmatpush1.bf16.msra.mxu0 %v261
        %282 = vmatprep.subr.bf16.mxu0 0
        %283 = vmatpush1.bf16.msra.mxu0 %v262
        %284 = vmatprep.subr.bf16.mxu0 0
        %285 = vmatpush1.bf16.msra.mxu0 %v263
        %286 = vmatprep.subr.bf16.mxu0 0
        %287 = vmatpush1.bf16.msra.mxu0 %v264
        %288 = vmatprep.subr.bf16.mxu0 0
        %289 = vmatpush1.bf16.msra.mxu0 %v265
        %290 = vmatprep.subr.bf16.mxu0 0
        %291 = vmatpush1.bf16.msra.mxu0 0
        %292 = vmatprep.subr.bf16.mxu0 0
        %293 = vmatpush1.bf16.msra.mxu0 0
        %294 = vmatprep.subr.bf16.mxu0 0
        %295 = vmatpush1.bf16.msra.mxu0 0
        %296 = vmatprep.subr.bf16.mxu0 0
        %297 = vmatpush1.bf16.msra.mxu0 0
        %298 = vmatprep.subr.bf16.mxu0 0
        %299 = vmatpush1.bf16.msra.mxu0 0
        %300 = vmatprep.subr.bf16.mxu0 0
        %301 = vmatpush1.bf16.msra.mxu0 0
        %302 = vmatprep.subr.bf16.mxu0 0
        %303 = vmatpush1.bf16.msra.mxu0 0
        %304 = vmatprep.subr.bf16.mxu0 0
        %305 = vmatpush1.bf16.msra.mxu0 0
        %306 = vmatprep.mubr.bf16.mxu0 0
        %307 = vmatmul.mubr.bf16.gmra.mrb[0].mxu0 %v202
        %v308 = vpop.f32.mrb[0].mxu0
        %v309 = vadd.f32 %v224, %v308
        %v310 = vpop.f32.mrb[0].mxu0
        %v311 = vpop.f32.mrb[0].mxu0
        %v312 = vpop.f32.mrb[0].mxu0
        %313 = vdwg.mxu0
        %v314 = vlaneseq
        %v315 = vand.u32 %v314, 127
        %vm316 = vcmp.lt.s32.totalorder %v315, 4
        %v317 = vsel %vm316, %v309, -inf
        %318 = vmax.xlane.f32.xlu0 %v317
        %v319 = vpop.xlane.xlu0 %318
        %v320 = vsub.f32 %v317, %v319
        %v321 = vmul.f32 %v320, 1.442695
        %v322 = vpow.pop %v321
        %323 = vadd.xlane.f32.xlu0 %v322
        %v324 = vpop.xlane.xlu0 %323
        %v325 = vrcp.pop %v324
        %v326 = vmul.f32 %v322, %v325
        %v327 = vld [vmem:[#allocation5] sm:$0xf]
        %v328 = vld [vmem:[#allocation5 + $0x14] sm:$0xf]
        %v329 = vld [vmem:[#allocation5 + $0x28] sm:$0xf]
        %v330 = vld [vmem:[#allocation5 + $0x3c] sm:$0xf]
        %v331 = vld [vmem:[#allocation5 + $0x50] sm:$0xf]
        %v332 = vld [vmem:[#allocation5 + $0x64] sm:$0xf]
        %v333 = vld [vmem:[#allocation5 + $0x78] sm:$0xf]
        %v334 = vld [vmem:[#allocation5 + $0x8c] sm:$0xf]
        %v335 = vld [vmem:[#allocation5 + $0xa0] sm:$0xf]
        %v336 = vld [vmem:[#allocation5 + $0xb4] sm:$0xf]
        %v337 = vld [vmem:[#allocation5 + $0xc8] sm:$0xf]
        %v338 = vld [vmem:[#allocation5 + $0xdc] sm:$0xf]
        %v339 = vld [vmem:[#allocation5 + $0xf0] sm:$0xf]
        %v340 = vld [vmem:[#allocation5 + $0x104] sm:$0xf]
        %v341 = vld [vmem:[#allocation5 + $0x118] sm:$0xf]
        %v342 = vld [vmem:[#allocation5 + $0x12c] sm:$0xf]
        %v343 = vld [vmem:[%s2] sm:$0x1]
        %v345 = vlaneseq
        %v346 = vshrl.u32 %v345, 7
        %v347 = vsub.s32 0, %v346
        %v348 = vrot.slane %v343, %v347
        %v366 = vunpack.c.l.b16 %v327
        %v367 = vunpack.c.l.b16 %v328
        %v368 = vunpack.c.l.b16 %v329
        %v369 = vunpack.c.l.b16 %v330
        %v370 = vunpack.c.l.b16 %v331
        %v371 = vunpack.c.l.b16 %v332
        %v372 = vunpack.c.l.b16 %v333
        %v373 = vunpack.c.l.b16 %v334
        %v374 = vunpack.c.l.b16 %v335
        %v375 = vunpack.c.l.b16 %v336
        %v376 = vunpack.c.l.b16 %v337
        %v377 = vunpack.c.l.b16 %v338
        %v378 = vunpack.c.l.b16 %v339
        %v379 = vunpack.c.l.b16 %v340
        %v380 = vunpack.c.l.b16 %v341
        %v381 = vunpack.c.l.b16 %v342
        %v382 = vpack.c.b16 %v367, %v366
        %v383 = vpack.c.b16 %v369, %v368
        %v384 = vpack.c.b16 %v371, %v370
        %v385 = vpack.c.b16 %v373, %v372
        %v386 = vpack.c.b16 %v375, %v374
        %v387 = vpack.c.b16 %v377, %v376
        %v388 = vpack.c.b16 %v379, %v378
        %v389 = vpack.c.b16 %v381, %v380
        %398 = vmatprep.subr.bf16.mxu0 0
        %399 = vmatpush1.bf16.msra.mxu0 %v382
        %400 = vmatprep.subr.bf16.mxu0 0
        %401 = vmatpush1.bf16.msra.mxu0 %v383
        %402 = vmatprep.subr.bf16.mxu0 0
        %403 = vmatpush1.bf16.msra.mxu0 %v384
        %404 = vmatprep.subr.bf16.mxu0 0
        %405 = vmatpush1.bf16.msra.mxu0 %v385
        %406 = vmatprep.subr.bf16.mxu0 0
        %407 = vmatpush1.bf16.msra.mxu0 %v386
        %408 = vmatprep.subr.bf16.mxu0 0
        %409 = vmatpush1.bf16.msra.mxu0 %v387
        %410 = vmatprep.subr.bf16.mxu0 0
        %411 = vmatpush1.bf16.msra.mxu0 %v388
        %412 = vmatprep.subr.bf16.mxu0 0
        %413 = vmatpush1.bf16.msra.mxu0 %v389
        %414 = vmatprep.subr.bf16.mxu0 0
        %415 = vmatpush1.bf16.msra.mxu0 0
        %416 = vmatprep.subr.bf16.mxu0 0
        %417 = vmatpush1.bf16.msra.mxu0 0
        %418 = vmatprep.subr.bf16.mxu0 0
        %419 = vmatpush1.bf16.msra.mxu0 0
        %420 = vmatprep.subr.bf16.mxu0 0
        %421 = vmatpush1.bf16.msra.mxu0 0
        %422 = vmatprep.subr.bf16.mxu0 0
        %423 = vmatpush1.bf16.msra.mxu0 0
        %424 = vmatprep.subr.bf16.mxu0 0
        %425 = vmatpush1.bf16.msra.mxu0 0
        %426 = vmatprep.subr.bf16.mxu0 0
        %427 = vmatpush1.bf16.msra.mxu0 0
        %428 = vmatprep.subr.bf16.mxu0 0
        %429 = vmatpush1.bf16.msra.mxu0 0
        %430 = vmatprep.mubr.bf16.mxu0 0
        %431 = vmatmul.mubr.bf16.gmra.mrb[0].mxu0 %v202
        %v432 = vpop.f32.mrb[0].mxu0
        %v433 = vadd.f32 %v348, %v432
        %v434 = vpop.f32.mrb[0].mxu0
        %v435 = vpop.f32.mrb[0].mxu0
        %v436 = vpop.f32.mrb[0].mxu0
        %437 = vdwg.mxu0
        %439 = vset.pattern.permute.xlu0 0
        %440 = vperm.xlu0 %439, %v326
        %v441 = vpop.permute.xlu0 %440
        %v443 = vmul.f32 %v441, %v433
        %v444 = vld [vmem:[#allocation5 + $0x4] sm:$0xf]
        %v445 = vld [vmem:[#allocation5 + $0x18] sm:$0xf]
        %v446 = vld [vmem:[#allocation5 + $0x2c] sm:$0xf]
        %v447 = vld [vmem:[#allocation5 + $0x40] sm:$0xf]
        %v448 = vld [vmem:[#allocation5 + $0x54] sm:$0xf]
        %v449 = vld [vmem:[#allocation5 + $0x68] sm:$0xf]
        %v450 = vld [vmem:[#allocation5 + $0x7c] sm:$0xf]
        %v451 = vld [vmem:[#allocation5 + $0x90] sm:$0xf]
        %v452 = vld [vmem:[#allocation5 + $0xa4] sm:$0xf]
        %v453 = vld [vmem:[#allocation5 + $0xb8] sm:$0xf]
        %v454 = vld [vmem:[#allocation5 + $0xcc] sm:$0xf]
        %v455 = vld [vmem:[#allocation5 + $0xe0] sm:$0xf]
        %v456 = vld [vmem:[#allocation5 + $0xf4] sm:$0xf]
        %v457 = vld [vmem:[#allocation5 + $0x108] sm:$0xf]
        %v458 = vld [vmem:[#allocation5 + $0x11c] sm:$0xf]
        %v459 = vld [vmem:[#allocation5 + $0x130] sm:$0xf]
        %v460 = vld [vmem:[%s2 + $0x1] sm:$0x1]
        %v462 = vlaneseq
        %v463 = vshrl.u32 %v462, 7
        %v464 = vsub.s32 0, %v463
        %v465 = vrot.slane %v460, %v464
        %v483 = vunpack.c.l.b16 %v444
        %v484 = vunpack.c.l.b16 %v445
        %v485 = vunpack.c.l.b16 %v446
        %v486 = vunpack.c.l.b16 %v447
        %v487 = vunpack.c.l.b16 %v448
        %v488 = vunpack.c.l.b16 %v449
        %v489 = vunpack.c.l.b16 %v450
        %v490 = vunpack.c.l.b16 %v451
        %v491 = vunpack.c.l.b16 %v452
        %v492 = vunpack.c.l.b16 %v453
        %v493 = vunpack.c.l.b16 %v454
        %v494 = vunpack.c.l.b16 %v455
        %v495 = vunpack.c.l.b16 %v456
        %v496 = vunpack.c.l.b16 %v457
        %v497 = vunpack.c.l.b16 %v458
        %v498 = vunpack.c.l.b16 %v459
        %v499 = vpack.c.b16 %v484, %v483
        %v500 = vpack.c.b16 %v486, %v485
        %v501 = vpack.c.b16 %v488, %v487
        %v502 = vpack.c.b16 %v490, %v489
        %v503 = vpack.c.b16 %v492, %v491
        %v504 = vpack.c.b16 %v494, %v493
        %v505 = vpack.c.b16 %v496, %v495
        %v506 = vpack.c.b16 %v498, %v497
        %515 = vmatprep.subr.bf16.mxu0 0
        %516 = vmatpush1.bf16.msra.mxu0 %v499
        %517 = vmatprep.subr.bf16.mxu0 0
        %518 = vmatpush1.bf16.msra.mxu0 %v500
        %519 = vmatprep.subr.bf16.mxu0 0
        %520 = vmatpush1.bf16.msra.mxu0 %v501
        %521 = vmatprep.subr.bf16.mxu0 0
        %522 = vmatpush1.bf16.msra.mxu0 %v502
        %523 = vmatprep.subr.bf16.mxu0 0
        %524 = vmatpush1.bf16.msra.mxu0 %v503
        %525 = vmatprep.subr.bf16.mxu0 0
        %526 = vmatpush1.bf16.msra.mxu0 %v504
        %527 = vmatprep.subr.bf16.mxu0 0
        %528 = vmatpush1.bf16.msra.mxu0 %v505
        %529 = vmatprep.subr.bf16.mxu0 0
        %530 = vmatpush1.bf16.msra.mxu0 %v506
        %531 = vmatprep.subr.bf16.mxu0 0
        %532 = vmatpush1.bf16.msra.mxu0 0
        %533 = vmatprep.subr.bf16.mxu0 0
        %534 = vmatpush1.bf16.msra.mxu0 0
        %535 = vmatprep.subr.bf16.mxu0 0
        %536 = vmatpush1.bf16.msra.mxu0 0
        %537 = vmatprep.subr.bf16.mxu0 0
        %538 = vmatpush1.bf16.msra.mxu0 0
        %539 = vmatprep.subr.bf16.mxu0 0
        %540 = vmatpush1.bf16.msra.mxu0 0
        %541 = vmatprep.subr.bf16.mxu0 0
        %542 = vmatpush1.bf16.msra.mxu0 0
        %543 = vmatprep.subr.bf16.mxu0 0
        %544 = vmatpush1.bf16.msra.mxu0 0
        %545 = vmatprep.subr.bf16.mxu0 0
        %546 = vmatpush1.bf16.msra.mxu0 0
        %547 = vmatprep.mubr.bf16.mxu0 0
        %548 = vmatmul.mubr.bf16.gmra.mrb[0].mxu0 %v202
        %v549 = vpop.f32.mrb[0].mxu0
        %v550 = vadd.f32 %v465, %v549
        %v551 = vpop.f32.mrb[0].mxu0
        %v552 = vpop.f32.mrb[0].mxu0
        %v553 = vpop.f32.mrb[0].mxu0
        %554 = vdwg.mxu0
        %555 = vset.pattern.permute.xlu0 1
        %556 = vperm.xlu0 %555, %v326
        %v557 = vpop.permute.xlu0 %556
        %v559 = vmul.f32 %v557, %v550
        %v560 = vadd.f32 %v443, %v559
        %v561 = vld [vmem:[#allocation5 + $0x8] sm:$0xf]
        %v562 = vld [vmem:[#allocation5 + $0x1c] sm:$0xf]
        %v563 = vld [vmem:[#allocation5 + $0x30] sm:$0xf]
        %v564 = vld [vmem:[#allocation5 + $0x44] sm:$0xf]
        %v565 = vld [vmem:[#allocation5 + $0x58] sm:$0xf]
        %v566 = vld [vmem:[#allocation5 + $0x6c] sm:$0xf]
        %v567 = vld [vmem:[#allocation5 + $0x80] sm:$0xf]
        %v568 = vld [vmem:[#allocation5 + $0x94] sm:$0xf]
        %v569 = vld [vmem:[#allocation5 + $0xa8] sm:$0xf]
        %v570 = vld [vmem:[#allocation5 + $0xbc] sm:$0xf]
        %v571 = vld [vmem:[#allocation5 + $0xd0] sm:$0xf]
        %v572 = vld [vmem:[#allocation5 + $0xe4] sm:$0xf]
        %v573 = vld [vmem:[#allocation5 + $0xf8] sm:$0xf]
        %v574 = vld [vmem:[#allocation5 + $0x10c] sm:$0xf]
        %v575 = vld [vmem:[#allocation5 + $0x120] sm:$0xf]
        %v576 = vld [vmem:[#allocation5 + $0x134] sm:$0xf]
        %v577 = vld [vmem:[%s2 + $0x2] sm:$0x1]
        %v579 = vlaneseq
        %v580 = vshrl.u32 %v579, 7
        %v581 = vsub.s32 0, %v580
        %v582 = vrot.slane %v577, %v581
        %v600 = vunpack.c.l.b16 %v561
        %v601 = vunpack.c.l.b16 %v562
        %v602 = vunpack.c.l.b16 %v563
        %v603 = vunpack.c.l.b16 %v564
        %v604 = vunpack.c.l.b16 %v565
        %v605 = vunpack.c.l.b16 %v566
        %v606 = vunpack.c.l.b16 %v567
        %v607 = vunpack.c.l.b16 %v568
        %v608 = vunpack.c.l.b16 %v569
        %v609 = vunpack.c.l.b16 %v570
        %v610 = vunpack.c.l.b16 %v571
        %v611 = vunpack.c.l.b16 %v572
        %v612 = vunpack.c.l.b16 %v573
        %v613 = vunpack.c.l.b16 %v574
        %v614 = vunpack.c.l.b16 %v575
        %v615 = vunpack.c.l.b16 %v576
        %v616 = vpack.c.b16 %v601, %v600
        %v617 = vpack.c.b16 %v603, %v602
        %v618 = vpack.c.b16 %v605, %v604
        %v619 = vpack.c.b16 %v607, %v606
        %v620 = vpack.c.b16 %v609, %v608
        %v621 = vpack.c.b16 %v611, %v610
        %v622 = vpack.c.b16 %v613, %v612
        %v623 = vpack.c.b16 %v615, %v614
        %632 = vmatprep.subr.bf16.mxu0 0
        %633 = vmatpush1.bf16.msra.mxu0 %v616
        %634 = vmatprep.subr.bf16.mxu0 0
        %635 = vmatpush1.bf16.msra.mxu0 %v617
        %636 = vmatprep.subr.bf16.mxu0 0
        %637 = vmatpush1.bf16.msra.mxu0 %v618
        %638 = vmatprep.subr.bf16.mxu0 0
        %639 = vmatpush1.bf16.msra.mxu0 %v619
        %640 = vmatprep.subr.bf16.mxu0 0
        %641 = vmatpush1.bf16.msra.mxu0 %v620
        %642 = vmatprep.subr.bf16.mxu0 0
        %643 = vmatpush1.bf16.msra.mxu0 %v621
        %644 = vmatprep.subr.bf16.mxu0 0
        %645 = vmatpush1.bf16.msra.mxu0 %v622
        %646 = vmatprep.subr.bf16.mxu0 0
        %647 = vmatpush1.bf16.msra.mxu0 %v623
        %648 = vmatprep.subr.bf16.mxu0 0
        %649 = vmatpush1.bf16.msra.mxu0 0
        %650 = vmatprep.subr.bf16.mxu0 0
        %651 = vmatpush1.bf16.msra.mxu0 0
        %652 = vmatprep.subr.bf16.mxu0 0
        %653 = vmatpush1.bf16.msra.mxu0 0
        %654 = vmatprep.subr.bf16.mxu0 0
        %655 = vmatpush1.bf16.msra.mxu0 0
        %656 = vmatprep.subr.bf16.mxu0 0
        %657 = vmatpush1.bf16.msra.mxu0 0
        %658 = vmatprep.subr.bf16.mxu0 0
        %659 = vmatpush1.bf16.msra.mxu0 0
        %660 = vmatprep.subr.bf16.mxu0 0
        %661 = vmatpush1.bf16.msra.mxu0 0
        %662 = vmatprep.subr.bf16.mxu0 0
        %663 = vmatpush1.bf16.msra.mxu0 0
        %664 = vmatprep.mubr.bf16.mxu0 0
        %665 = vmatmul.mubr.bf16.gmra.mrb[0].mxu0 %v202
        %v666 = vpop.f32.mrb[0].mxu0
        %v667 = vadd.f32 %v582, %v666
        %v668 = vpop.f32.mrb[0].mxu0
        %v669 = vpop.f32.mrb[0].mxu0
        %v670 = vpop.f32.mrb[0].mxu0
        %671 = vdwg.mxu0
        %672 = vset.pattern.permute.xlu0 2
        %673 = vperm.xlu0 %672, %v326
        %v674 = vpop.permute.xlu0 %673
        %v676 = vmul.f32 %v674, %v667
        %v677 = vadd.f32 %v560, %v676
        %v678 = vld [vmem:[#allocation5 + $0xc] sm:$0xf]
        %v679 = vld [vmem:[#allocation5 + $0x20] sm:$0xf]
        %v680 = vld [vmem:[#allocation5 + $0x34] sm:$0xf]
        %v681 = vld [vmem:[#allocation5 + $0x48] sm:$0xf]
        %v682 = vld [vmem:[#allocation5 + $0x5c] sm:$0xf]
        %v683 = vld [vmem:[#allocation5 + $0x70] sm:$0xf]
        %v684 = vld [vmem:[#allocation5 + $0x84] sm:$0xf]
        %v685 = vld [vmem:[#allocation5 + $0x98] sm:$0xf]
        %v686 = vld [vmem:[#allocation5 + $0xac] sm:$0xf]
        %v687 = vld [vmem:[#allocation5 + $0xc0] sm:$0xf]
        %v688 = vld [vmem:[#allocation5 + $0xd4] sm:$0xf]
        %v689 = vld [vmem:[#allocation5 + $0xe8] sm:$0xf]
        %v690 = vld [vmem:[#allocation5 + $0xfc] sm:$0xf]
        %v691 = vld [vmem:[#allocation5 + $0x110] sm:$0xf]
        %v692 = vld [vmem:[#allocation5 + $0x124] sm:$0xf]
        %v693 = vld [vmem:[#allocation5 + $0x138] sm:$0xf]
        %v694 = vld [vmem:[%s2 + $0x3] sm:$0x1]
        %v696 = vlaneseq
        %v697 = vshrl.u32 %v696, 7
        %v698 = vsub.s32 0, %v697
        %v699 = vrot.slane %v694, %v698
        %v717 = vunpack.c.l.b16 %v678
        %v718 = vunpack.c.l.b16 %v679
        %v719 = vunpack.c.l.b16 %v680
        %v720 = vunpack.c.l.b16 %v681
        %v721 = vunpack.c.l.b16 %v682
        %v722 = vunpack.c.l.b16 %v683
        %v723 = vunpack.c.l.b16 %v684
        %v724 = vunpack.c.l.b16 %v685
        %v725 = vunpack.c.l.b16 %v686
        %v726 = vunpack.c.l.b16 %v687
        %v727 = vunpack.c.l.b16 %v688
        %v728 = vunpack.c.l.b16 %v689
        %v729 = vunpack.c.l.b16 %v690
        %v730 = vunpack.c.l.b16 %v691
        %v731 = vunpack.c.l.b16 %v692
        %v732 = vunpack.c.l.b16 %v693
        %v733 = vpack.c.b16 %v718, %v717
        %v734 = vpack.c.b16 %v720, %v719
        %v735 = vpack.c.b16 %v722, %v721
        %v736 = vpack.c.b16 %v724, %v723
        %v737 = vpack.c.b16 %v726, %v725
        %v738 = vpack.c.b16 %v728, %v727
        %v739 = vpack.c.b16 %v730, %v729
        %v740 = vpack.c.b16 %v732, %v731
        %749 = vmatprep.subr.bf16.mxu0 0
        %750 = vmatpush1.bf16.msra.mxu0 %v733
        %751 = vmatprep.subr.bf16.mxu0 0
        %752 = vmatpush1.bf16.msra.mxu0 %v734
        %753 = vmatprep.subr.bf16.mxu0 0
        %754 = vmatpush1.bf16.msra.mxu0 %v735
        %755 = vmatprep.subr.bf16.mxu0 0
        %756 = vmatpush1.bf16.msra.mxu0 %v736
        %757 = vmatprep.subr.bf16.mxu0 0
        %758 = vmatpush1.bf16.msra.mxu0 %v737
        %759 = vmatprep.subr.bf16.mxu0 0
        %760 = vmatpush1.bf16.msra.mxu0 %v738
        %761 = vmatprep.subr.bf16.mxu0 0
        %762 = vmatpush1.bf16.msra.mxu0 %v739
        %763 = vmatprep.subr.bf16.mxu0 0
        %764 = vmatpush1.bf16.msra.mxu0 %v740
        %765 = vmatprep.subr.bf16.mxu0 0
        %766 = vmatpush1.bf16.msra.mxu0 0
        %767 = vmatprep.subr.bf16.mxu0 0
        %768 = vmatpush1.bf16.msra.mxu0 0
        %769 = vmatprep.subr.bf16.mxu0 0
        %770 = vmatpush1.bf16.msra.mxu0 0
        %771 = vmatprep.subr.bf16.mxu0 0
        %772 = vmatpush1.bf16.msra.mxu0 0
        %773 = vmatprep.subr.bf16.mxu0 0
        %774 = vmatpush1.bf16.msra.mxu0 0
        %775 = vmatprep.subr.bf16.mxu0 0
        %776 = vmatpush1.bf16.msra.mxu0 0
        %777 = vmatprep.subr.bf16.mxu0 0
        %778 = vmatpush1.bf16.msra.mxu0 0
        %779 = vmatprep.subr.bf16.mxu0 0
        %780 = vmatpush1.bf16.msra.mxu0 0
        %781 = vmatprep.mubr.bf16.mxu0 0
        %782 = vmatmul.mubr.bf16.gmra.mrb[0].mxu0 %v202
        %v783 = vpop.f32.mrb[0].mxu0
        %v784 = vadd.f32 %v699, %v783
        %v785 = vpop.f32.mrb[0].mxu0
        %v786 = vpop.f32.mrb[0].mxu0
        %v787 = vpop.f32.mrb[0].mxu0
        %788 = vdwg.mxu0
        %789 = vset.pattern.permute.xlu0 3
        %790 = vperm.xlu0 %789, %v326
        %v791 = vpop.permute.xlu0 %790
        %v793 = vmul.f32 %v791, %v784
        %v794 = vadd.f32 %v677, %v793
        %795 = vst [vmem:[%s200] sm:$0xff] %v794
        %s796 = sand.u32 %s97, 1
        %s797 = scalar_lea.sflag [#allocation4], %s796
        %s798 = sand.u32 %s97, 1
        %s799 = smul.addr %s798, 8
        %s800 = scalar_lea.vmem [#allocation7], %s799
        // Predicated region
        $region41: #{tpu_custom_call.1} parent=31 // pred_check
          %p801 = pneg %p107
        $region42: #{tpu_custom_call.1} parent=31 // pred_check_branch
          %803 = sbr.rel (%p801) target = $region44
        $region43: #{tpu_custom_call.1} parent=31 // pred_region
          %s805 = ssub.s32 128, 128
          %806 = vsyncadd %s797, %s805
          %s807 = smul.addr %s21, 128
          %s808 = scalar_lea.hbm %s3, %s807
          %s810 = sshll.u32 %s800, 4
          %s811 = int_to_ptr.vmem [resolvable:$true] %s810
          %813 = dma.vmem_to_hbm [thread:$0]  %s811, 128, %s808, %s797
        $region44: #{tpu_custom_call.1} parent=31 // pred_fallthru
          _
      $region32: #{tpu_custom_call.1} parent=5 // pred_fallthru
        _
      %p814 = scmp.le.s32.totalorder 2, %s16
      // Predicated region
      $region45: #{tpu_custom_call.1} parent=5 // pred_check
        %p815 = pneg %p814
      $region46: #{tpu_custom_call.1} parent=5 // pred_check_branch
        %817 = sbr.rel (%p815) target = $region48
      $region47: #{tpu_custom_call.1} parent=5 // pred_region
        %s818 = ssub.s32 %s16, 2
        // Predicated region
        $region49: #{tpu_custom_call.1} parent=47 // pred_check
          %p819 = pneg %p113
        $region50: #{tpu_custom_call.1} parent=47 // pred_check_branch
          %821 = sbr.rel (%p819) target = $region52
        $region51: #{tpu_custom_call.1} parent=47 // pred_region
          %s822 = sand.u32 %s98, 1
          %s823 = scalar_lea.sflag [#allocation4], %s822
          %s824 = sand.u32 %s98, 1
          %s825 = smul.addr %s824, 8
          %s826 = scalar_lea.vmem [#allocation7], %s825
          %827 = dma.done %s823, 128
        $region52: #{tpu_custom_call.1} parent=47 // pred_fallthru
          _
      $region48: #{tpu_custom_call.1} parent=5 // pred_fallthru
        _
    $region6: #{tpu_custom_call.1} parent=1 // loop_footer
      %s20 = sadd.s32 1, %s16
    $region7: #{tpu_custom_call.1} parent=1 // loop_footer_branch
      %15 = sbr.rel target = $region3
    $region8: #{tpu_custom_call.1} parent=1 // loop_exit
      _
    %828 = vsyncpa [#allocation3], 1
    %s829 = scalar_lea.sflag [#allocation3], 1
    %830 = vsyncpa %s829, 1
    %831 = vsyncpa [#allocation6], 1
    %832 = vsyncpa [#allocation4], 1
    %s833 = scalar_lea.sflag [#allocation4], 1
    %834 = vsyncpa %s833, 1

// kernel: tpu_custom_call.1
$region0: #{tpu_custom_call.1}
  #allocation0 [shape = 'u32[]', space=smem, size = 0x4, offset = 0x4, fixed_abs, tag = 'smem constant byte address 0x4 - core index']
  #allocation1 [shape = 'u32[144,128]{1,0:T(1,128)}', space=vmem, size = 0x12000, scoped, tag = 'internal scratch']
  %s0 = inlined_call_operand.hbm [shape: bf16[16,128], index: 0, kind: input, shape index: {}]
  %s1 = inlined_call_operand.hbm [shape: bf16[128,640], index: 1, kind: input, shape index: {}]
  %s2 = inlined_call_operand.vmem [shape: f32[1,640], index: 2, kind: input, shape index: {}]
  %s3 = inlined_call_operand.hbm [shape: f32[16,128], index: 3, kind: output, shape index: {}]
  %s4 = sld [smem:[#allocation0]]
  $region53: #{tpu_custom_call.1} parent=0
    _
  %s6 = ssub.s32 1, %s4
  %s7 = scalar_select 0, %s6, %s4
  $region1: #{tpu_custom_call.1} parent=0
    #allocation2 [shape = 'u8[4096]{0}', space=vmem, size = 0x1000, scoped, tag = 'input window, operand 0']
    #allocation3 [shape = 's32[2]{0}', space=sflag, size = 0x8, scoped, tag = 'scoped memory for tpu_custom_call.1']
    #allocation4 [shape = 's32[2]{0}', space=sflag, size = 0x8, scoped, tag = 'scoped memory for tpu_custom_call.1']
    #allocation5 [shape = 'u8[163840]{0}', space=vmem, size = 0x28000, scoped, tag = 'input window, operand 1, single buffered']
    #allocation6 [shape = 's32[1]{0}', space=sflag, size = 0x4, scoped, tag = 'scoped memory for tpu_custom_call.1']
    #allocation7 [shape = 'u8[8192]{0}', space=vmem, size = 0x2000, scoped, tag = 'output window, operand 0']
    %8 = vsyncpa [#allocation3], 0
    %s9 = scalar_lea.sflag [#allocation3], 1
    %10 = vsyncpa %s9, 0
    %11 = vsyncpa [#allocation6], 0
    %12 = vsyncpa [#allocation4], 0
    %s13 = scalar_lea.sflag [#allocation4], 1
    %14 = vsyncpa %s13, 0
    loop: start=0, step=1, limit=4
    $region2: #{tpu_custom_call.1} parent=1 // loop_pre_header
      _
    $region3: #{tpu_custom_call.1} parent=1 // loop_header
      %s16 = sphi 0, %s20
      %p17 = scmp.ge.s32.totalorder %s16, 4
      %s26 = sphi 0, %s28
      %s29 = sphi 0, %s26
      %s30 = sphi 0, %s29
      %s46 = sphi 0, %s30
      %s50 = sphi 0, %s50
      %s52 = sphi 0, %s50
      %s53 = sphi 0, %s52
      %s67 = sphi 0, %s53
      %s71 = sphi 0, %s71
      %s73 = sphi 0, %s71
      %s74 = sphi 0, %s73
      %s88 = sphi 0, %s74
      %s94 = sphi 0, %s96
      %s97 = sphi 0, %s94
      %s98 = sphi 0, %s97
      %s114 = sphi 0, %s98
    $region4: #{tpu_custom_call.1} parent=1 // loop_header_branch
      %19 = sbr.rel (%p17) target = $region8
    $region5: #{tpu_custom_call.1} parent=1 // loop_body
      %s21 = ssub.s32 %s16, 1
      %s22 = ssub.s32 %s16, 2
      %s23 = sadd.s32 %s16, 1
      %s24 = ssub.s32 %s16, %s23
      %p25 = scmp.eq.s32.totalorder %s24, 0
      %s27 = sadd.s32 %s26, 1
      %s28 = scalar_select %p25, %s26, %s27
      %p31 = pneg %p25
      %p32 = scmp.eq.s32.totalorder %s16, 1
      %p33 = por %p31, %p32
      %p34 = scmp.ne.s32.totalorder %s26, %s29
      %p35 = scmp.eq.s32.totalorder %s16, 0
      %p36 = por %p34, %p35
      %p37 = scmp.ne.s32.totalorder %s26, %s29
      %p38 = scmp.eq.s32.totalorder %s21, 1
      %p39 = por %p37, %p38
      %p40 = scmp.ne.s32.totalorder %s29, %s30
      %p41 = scmp.eq.s32.totalorder %s21, 0
      %p42 = por %p40, %p41
      %p43 = scmp.ne.s32.totalorder %s29, %s30
      %p44 = scmp.eq.s32.totalorder %s22, 1
      %p45 = por %p43, %p44
      %p47 = scmp.ne.s32.totalorder %s30, %s46
      %p48 = scmp.eq.s32.totalorder %s22, 0
      %p49 = por %p47, %p48
      %s51 = sadd.s32 %s50, 1
      %p54 = scmp.eq.s32.totalorder %s16, 1
      %p55 = scmp.ne.s32.totalorder %s50, %s52
      %p56 = scmp.eq.s32.totalorder %s16, 0
      %p57 = por %p55, %p56
      %p58 = scmp.ne.s32.totalorder %s50, %s52
      %p59 = scmp.eq.s32.totalorder %s21, 1
      %p60 = por %p58, %p59
      %p61 = scmp.ne.s32.totalorder %s52, %s53
      %p62 = scmp.eq.s32.totalorder %s21, 0
      %p63 = por %p61, %p62
      %p64 = scmp.ne.s32.totalorder %s52, %s53
      %p65 = scmp.eq.s32.totalorder %s22, 1
      %p66 = por %p64, %p65
      %p68 = scmp.ne.s32.totalorder %s53, %s67
      %p69 = scmp.eq.s32.totalorder %s22, 0
      %p70 = por %p68, %p69
      %s72 = sadd.s32 %s71, 1
      %p75 = scmp.eq.s32.totalorder %s16, 1
      %p76 = scmp.ne.s32.totalorder %s71, %s73
      %p77 = scmp.eq.s32.totalorder %s16, 0
      %p78 = por %p76, %p77
      %p79 = scmp.ne.s32.totalorder %s71, %s73
      %p80 = scmp.eq.s32.totalorder %s21, 1
      %p81 = por %p79, %p80
      %p82 = scmp.ne.s32.totalorder %s73, %s74
      %p83 = scmp.eq.s32.totalorder %s21, 0
      %p84 = por %p82, %p83
      %p85 = scmp.ne.s32.totalorder %s73, %s74
      %p86 = scmp.eq.s32.totalorder %s22, 1
      %p87 = por %p85, %p86
      %p89 = scmp.ne.s32.totalorder %s74, %s88
      %p90 = scmp.eq.s32.totalorder %s22, 0
      %p91 = por %p89, %p90
      %s92 = ssub.s32 %s16, %s23
      %p93 = scmp.eq.s32.totalorder %s92, 0
      %s95 = sadd.s32 %s94, 1
      %s96 = scalar_select %p93, %s94, %s95
      %p99 = pneg %p93
      %p100 = scmp.eq.s32.totalorder %s16, 1
      %p101 = por %p99, %p100
      %p102 = scmp.ne.s32.totalorder %s94, %s97
      %p103 = scmp.eq.s32.totalorder %s16, 0
      %p104 = por %p102, %p103
      %p105 = scmp.ne.s32.totalorder %s94, %s97
      %p106 = scmp.eq.s32.totalorder %s21, 1
      %p107 = por %p105, %p106
      %p108 = scmp.ne.s32.totalorder %s97, %s98
      %p109 = scmp.eq.s32.totalorder %s21, 0
      %p110 = por %p108, %p109
      %p111 = scmp.ne.s32.totalorder %s97, %s98
      %p112 = scmp.eq.s32.totalorder %s22, 1
      %p113 = por %p111, %p112
      %p115 = scmp.ne.s32.totalorder %s98, %s114
      %p116 = scmp.eq.s32.totalorder %s22, 0
      %p117 = por %p115, %p116
      %p118 = scmp.le.s32.totalorder 1, %s16
      %p119 = scmp.lt.s32.totalorder %s16, 3
      %p120 = pnand %p118, %p119
      %p121 = pneg %p120
      // Predicated region
      $region9: #{tpu_custom_call.1} parent=5 // pred_check
        _
      $region10: #{tpu_custom_call.1} parent=5 // pred_check_branch
        %123 = sbr.rel (%p120) target = $region12
      $region11: #{tpu_custom_call.1} parent=5 // pred_region
        %s124 = ssub.s32 %s16, 1
        // Predicated region
        $region13: #{tpu_custom_call.1} parent=11 // pred_check
          %p125 = pneg %p63
        $region14: #{tpu_custom_call.1} parent=11 // pred_check_branch
          %127 = sbr.rel (%p125) target = $region16
        $region15: #{tpu_custom_call.1} parent=11 // pred_region
          %s129 = ssub.s32 5120, 5120
          %130 = vsyncadd [#allocation6], %s129
          %s131 = sshll.u32 [#allocation5], 4
          %s132 = int_to_ptr.vmem [resolvable:$true] %s131
          %137 = dma.hbm_to_vmem [thread:$0]  %s1, 5120, %s132, [#allocation6], 320, 320, 20
        $region16: #{tpu_custom_call.1} parent=11 // pred_fallthru
          _
        // Predicated region
        $region17: #{tpu_custom_call.1} parent=11 // pred_check
          %p138 = pneg %p84
        $region18: #{tpu_custom_call.1} parent=11 // pred_check_branch
          %140 = sbr.rel (%p138) target = $region20
        $region19: #{tpu_custom_call.1} parent=11 // pred_region
          _
        $region20: #{tpu_custom_call.1} parent=11 // pred_fallthru
          _
      $region12: #{tpu_custom_call.1} parent=5 // pred_fallthru
        _
      %p141 = scmp.lt.s32.totalorder %s16, 2
      // Predicated region
      $region21: #{tpu_custom_call.1} parent=5 // pred_check
        %p142 = pneg %p141
      $region22: #{tpu_custom_call.1} parent=5 // pred_check_branch
        %144 = sbr.rel (%p142) target = $region24
      $region23: #{tpu_custom_call.1} parent=5 // pred_region
        // Predicated region
        $region25: #{tpu_custom_call.1} parent=23 // pred_check
          %p145 = pneg %p36
        $region26: #{tpu_custom_call.1} parent=23 // pred_check_branch
          %147 = sbr.rel (%p145) target = $region28
        $region27: #{tpu_custom_call.1} parent=23 // pred_region
          %s148 = sand.u32 %s26, 1
          %s149 = scalar_lea.sflag [#allocation3], %s148
          %s150 = sand.u32 %s26, 1
          %s151 = smul.addr %s150, 4
          %s152 = scalar_lea.vmem [#allocation2], %s151
          %s154 = ssub.s32 64, 64
          %155 = vsyncadd %s149, %s154
          %s156 = smul.addr %s16, 64
          %s157 = scalar_lea.hbm %s0, %s156
          %s159 = sshll.u32 %s152, 4
          %s160 = int_to_ptr.vmem [resolvable:$true] %s159
          %162 = dma.hbm_to_vmem [thread:$0]  %s157, 64, %s160, %s149
        $region28: #{tpu_custom_call.1} parent=23 // pred_fallthru
          _
      $region24: #{tpu_custom_call.1} parent=5 // pred_fallthru
        _
      %p163 = scmp.le.s32.totalorder 1, %s16
      %p164 = scmp.lt.s32.totalorder %s16, 3
      %p165 = pnand %p163, %p164
      %p166 = pneg %p165
      // Predicated region
      $region29: #{tpu_custom_call.1} parent=5 // pred_check
        _
      $region30: #{tpu_custom_call.1} parent=5 // pred_check_branch
        %168 = sbr.rel (%p165) target = $region32
      $region31: #{tpu_custom_call.1} parent=5 // pred_region
        %s169 = ssub.s32 %s16, 1
        %s170 = sand.u32 %s29, 1
        %s171 = scalar_lea.sflag [#allocation3], %s170
        %s172 = sand.u32 %s29, 1
        %s173 = smul.addr %s172, 4
        %s174 = scalar_lea.vmem [#allocation2], %s173
        // Predicated region
        $region33: #{tpu_custom_call.1} parent=31 // pred_check
          %p175 = pneg %p42
        $region34: #{tpu_custom_call.1} parent=31 // pred_check_branch
          %177 = sbr.rel (%p175) target = $region36
        $region35: #{tpu_custom_call.1} parent=31 // pred_region
          %178 = dma.done %s171, 64
        $region36: #{tpu_custom_call.1} parent=31 // pred_fallthru
          _
        // Predicated region
        $region37: #{tpu_custom_call.1} parent=31 // pred_check
          %p179 = pneg %p63
        $region38: #{tpu_custom_call.1} parent=31 // pred_check_branch
          %181 = sbr.rel (%p179) target = $region40
        $region39: #{tpu_custom_call.1} parent=31 // pred_region
          %182 = dma.done [#allocation6], 5120
        $region40: #{tpu_custom_call.1} parent=31 // pred_fallthru
          _
        %s183 = sand.u32 %s29, 1
        %s184 = scalar_lea.sflag [#allocation3], %s183
        %s185 = sand.u32 %s29, 1
        %s186 = smul.addr %s185, 4
        %s187 = scalar_lea.vmem [#allocation2], %s186
        %p188 = pneg %p42
        %p189 = pneg %p39
        %p190 = pneg %p63
        %p191 = pneg %p60
        %p192 = pneg %p84
        %p193 = pneg %p81
        %p194 = pneg %p110
        %p195 = pneg %p107
        %s196 = sand.u32 %s97, 1
        %s197 = scalar_lea.sflag [#allocation4], %s196
        %s198 = sand.u32 %s97, 1
        %s199 = smul.addr %s198, 8
        %s200 = scalar_lea.vmem [#allocation7], %s199
        %v202 = vld [vmem:[%s174] sm:$0xf]
        %v203 = vld [vmem:[#allocation5 + $0x10] sm:$0xf]
        %v204 = vld [vmem:[#allocation5 + $0x24] sm:$0xf]
        %v205 = vld [vmem:[#allocation5 + $0x38] sm:$0xf]
        %v206 = vld [vmem:[#allocation5 + $0x4c] sm:$0xf]
        %v207 = vld [vmem:[#allocation5 + $0x60] sm:$0xf]
        %v208 = vld [vmem:[#allocation5 + $0x74] sm:$0xf]
        %v209 = vld [vmem:[#allocation5 + $0x88] sm:$0xf]
        %v210 = vld [vmem:[#allocation5 + $0x9c] sm:$0xf]
        %v211 = vld [vmem:[#allocation5 + $0xb0] sm:$0xf]
        %v212 = vld [vmem:[#allocation5 + $0xc4] sm:$0xf]
        %v213 = vld [vmem:[#allocation5 + $0xd8] sm:$0xf]
        %v214 = vld [vmem:[#allocation5 + $0xec] sm:$0xf]
        %v215 = vld [vmem:[#allocation5 + $0x100] sm:$0xf]
        %v216 = vld [vmem:[#allocation5 + $0x114] sm:$0xf]
        %v217 = vld [vmem:[#allocation5 + $0x128] sm:$0xf]
        %v218 = vld [vmem:[#allocation5 + $0x13c] sm:$0xf]
        %v219 = vld [vmem:[%s2 + $0x4] sm:$0x1]
        %v221 = vlaneseq
        %v222 = vshrl.u32 %v221, 7
        %v223 = vsub.s32 0, %v222
        %v224 = vrot.slane %v219, %v223
        %v242 = vunpack.c.l.b16 %v203
        %v243 = vunpack.c.l.b16 %v204
        %v244 = vunpack.c.l.b16 %v205
        %v245 = vunpack.c.l.b16 %v206
        %v246 = vunpack.c.l.b16 %v207
        %v247 = vunpack.c.l.b16 %v208
        %v248 = vunpack.c.l.b16 %v209
        %v249 = vunpack.c.l.b16 %v210
        %v250 = vunpack.c.l.b16 %v211
        %v251 = vunpack.c.l.b16 %v212
        %v252 = vunpack.c.l.b16 %v213
        %v253 = vunpack.c.l.b16 %v214
        %v254 = vunpack.c.l.b16 %v215
        %v255 = vunpack.c.l.b16 %v216
        %v256 = vunpack.c.l.b16 %v217
        %v257 = vunpack.c.l.b16 %v218
        %v258 = vpack.c.b16 %v243, %v242
        %v259 = vpack.c.b16 %v245, %v244
        %v260 = vpack.c.b16 %v247, %v246
        %v261 = vpack.c.b16 %v249, %v248
        %v262 = vpack.c.b16 %v251, %v250
        %v263 = vpack.c.b16 %v253, %v252
        %v264 = vpack.c.b16 %v255, %v254
        %v265 = vpack.c.b16 %v257, %v256
        %274 = vmatprep.subr.bf16.mxu0 0
        %275 = vmatpush1.bf16.msra.mxu0 %v258
        %276 = vmatprep.subr.bf16.mxu0 0
        %277 = vmatpush1.bf16.msra.mxu0 %v259
        %278 = vmatprep.subr.bf16.mxu0 0
        %279 = vmatpush1.bf16.msra.mxu0 %v260
        %280 = vmatprep.subr.bf16.mxu0 0
        %281 = vmatpush1.bf16.msra.mxu0 %v261
        %282 = vmatprep.subr.bf16.mxu0 0
        %283 = vmatpush1.bf16.msra.mxu0 %v262
        %284 = vmatprep.subr.bf16.mxu0 0
        %285 = vmatpush1.bf16.msra.mxu0 %v263
        %286 = vmatprep.subr.bf16.mxu0 0
        %287 = vmatpush1.bf16.msra.mxu0 %v264
        %288 = vmatprep.subr.bf16.mxu0 0
        %289 = vmatpush1.bf16.msra.mxu0 %v265
        %290 = vmatprep.subr.bf16.mxu0 0
        %291 = vmatpush1.bf16.msra.mxu0 0
        %292 = vmatprep.subr.bf16.mxu0 0
        %293 = vmatpush1.bf16.msra.mxu0 0
        %294 = vmatprep.subr.bf16.mxu0 0
        %295 = vmatpush1.bf16.msra.mxu0 0
        %296 = vmatprep.subr.bf16.mxu0 0
        %297 = vmatpush1.bf16.msra.mxu0 0
        %298 = vmatprep.subr.bf16.mxu0 0
        %299 = vmatpush1.bf16.msra.mxu0 0
        %300 = vmatprep.subr.bf16.mxu0 0
        %301 = vmatpush1.bf16.msra.mxu0 0
        %302 = vmatprep.subr.bf16.mxu0 0
        %303 = vmatpush1.bf16.msra.mxu0 0
        %304 = vmatprep.subr.bf16.mxu0 0
        %305 = vmatpush1.bf16.msra.mxu0 0
        %306 = vmatprep.mubr.bf16.mxu0 0
        %307 = vmatmul.mubr.bf16.gmra.mrb[0].mxu0 %v202
        %v308 = vpop.f32.mrb[0].mxu0
        %v309 = vadd.f32 %v224, %v308
        %v310 = vpop.f32.mrb[0].mxu0
        %v311 = vpop.f32.mrb[0].mxu0
        %v312 = vpop.f32.mrb[0].mxu0
        %313 = vdwg.mxu0
        %v314 = vlaneseq
        %v315 = vand.u32 %v314, 127
        %vm316 = vcmp.lt.s32.totalorder %v315, 4
        %v317 = vsel %vm316, %v309, -inf
        %318 = vmax.xlane.f32.xlu0 %v317
        %v319 = vpop.xlane.xlu0 %318
        %v320 = vsub.f32 %v317, %v319
        %v321 = vmul.f32 %v320, 1.442695
        %v322 = vpow.pop %v321
        %323 = vadd.xlane.f32.xlu0 %v322
        %v324 = vpop.xlane.xlu0 %323
        %v325 = vrcp.pop %v324
        %v326 = vmul.f32 %v322, %v325
        %v327 = vld [vmem:[#allocation5] sm:$0xf]
        %v328 = vld [vmem:[#allocation5 + $0x14] sm:$0xf]
        %v329 = vld [vmem:[#allocation5 + $0x28] sm:$0xf]
        %v330 = vld [vmem:[#allocation5 + $0x3c] sm:$0xf]
        %v331 = vld [vmem:[#allocation5 + $0x50] sm:$0xf]
        %v332 = vld [vmem:[#allocation5 + $0x64] sm:$0xf]
        %v333 = vld [vmem:[#allocation5 + $0x78] sm:$0xf]
        %v334 = vld [vmem:[#allocation5 + $0x8c] sm:$0xf]
        %v335 = vld [vmem:[#allocation5 + $0xa0] sm:$0xf]
        %v336 = vld [vmem:[#allocation5 + $0xb4] sm:$0xf]
        %v337 = vld [vmem:[#allocation5 + $0xc8] sm:$0xf]
        %v338 = vld [vmem:[#allocation5 + $0xdc] sm:$0xf]
        %v339 = vld [vmem:[#allocation5 + $0xf0] sm:$0xf]
        %v340 = vld [vmem:[#allocation5 + $0x104] sm:$0xf]
        %v341 = vld [vmem:[#allocation5 + $0x118] sm:$0xf]
        %v342 = vld [vmem:[#allocation5 + $0x12c] sm:$0xf]
        %v343 = vld [vmem:[%s2] sm:$0x1]
        %v345 = vlaneseq
        %v346 = vshrl.u32 %v345, 7
        %v347 = vsub.s32 0, %v346
        %v348 = vrot.slane %v343, %v347
        %v366 = vunpack.c.l.b16 %v327
        %v367 = vunpack.c.l.b16 %v328
        %v368 = vunpack.c.l.b16 %v329
        %v369 = vunpack.c.l.b16 %v330
        %v370 = vunpack.c.l.b16 %v331
        %v371 = vunpack.c.l.b16 %v332
        %v372 = vunpack.c.l.b16 %v333
        %v373 = vunpack.c.l.b16 %v334
        %v374 = vunpack.c.l.b16 %v335
        %v375 = vunpack.c.l.b16 %v336
        %v376 = vunpack.c.l.b16 %v337
        %v377 = vunpack.c.l.b16 %v338
        %v378 = vunpack.c.l.b16 %v339
        %v379 = vunpack.c.l.b16 %v340
        %v380 = vunpack.c.l.b16 %v341
        %v381 = vunpack.c.l.b16 %v342
        %v382 = vpack.c.b16 %v367, %v366
        %v383 = vpack.c.b16 %v369, %v368
        %v384 = vpack.c.b16 %v371, %v370
        %v385 = vpack.c.b16 %v373, %v372
        %v386 = vpack.c.b16 %v375, %v374
        %v387 = vpack.c.b16 %v377, %v376
        %v388 = vpack.c.b16 %v379, %v378
        %v389 = vpack.c.b16 %v381, %v380
        %398 = vmatprep.subr.bf16.mxu0 0
        %399 = vmatpush1.bf16.msra.mxu0 %v382
        %400 = vmatprep.subr.bf16.mxu0 0
        %401 = vmatpush1.bf16.msra.mxu0 %v383
        %402 = vmatprep.subr.bf16.mxu0 0
        %403 = vmatpush1.bf16.msra.mxu0 %v384
        %404 = vmatprep.subr.bf16.mxu0 0
        %405 = vmatpush1.bf16.msra.mxu0 %v385
        %406 = vmatprep.subr.bf16.mxu0 0
        %407 = vmatpush1.bf16.msra.mxu0 %v386
        %408 = vmatprep.subr.bf16.mxu0 0
        %409 = vmatpush1.bf16.msra.mxu0 %v387
        %410 = vmatprep.subr.bf16.mxu0 0
        %411 = vmatpush1.bf16.msra.mxu0 %v388
        %412 = vmatprep.subr.bf16.mxu0 0
        %413 = vmatpush1.bf16.msra.mxu0 %v389
        %414 = vmatprep.subr.bf16.mxu0 0
        %415 = vmatpush1.bf16.msra.mxu0 0
        %416 = vmatprep.subr.bf16.mxu0 0
        %417 = vmatpush1.bf16.msra.mxu0 0
        %418 = vmatprep.subr.bf16.mxu0 0
        %419 = vmatpush1.bf16.msra.mxu0 0
        %420 = vmatprep.subr.bf16.mxu0 0
        %421 = vmatpush1.bf16.msra.mxu0 0
        %422 = vmatprep.subr.bf16.mxu0 0
        %423 = vmatpush1.bf16.msra.mxu0 0
        %424 = vmatprep.subr.bf16.mxu0 0
        %425 = vmatpush1.bf16.msra.mxu0 0
        %426 = vmatprep.subr.bf16.mxu0 0
        %427 = vmatpush1.bf16.msra.mxu0 0
        %428 = vmatprep.subr.bf16.mxu0 0
        %429 = vmatpush1.bf16.msra.mxu0 0
        %430 = vmatprep.mubr.bf16.mxu0 0
        %431 = vmatmul.mubr.bf16.gmra.mrb[0].mxu0 %v202
        %v432 = vpop.f32.mrb[0].mxu0
        %v433 = vadd.f32 %v348, %v432
        %v434 = vpop.f32.mrb[0].mxu0
        %v435 = vpop.f32.mrb[0].mxu0
        %v436 = vpop.f32.mrb[0].mxu0
        %437 = vdwg.mxu0
        %439 = vset.pattern.permute.xlu0 0
        %440 = vperm.xlu0 %439, %v326
        %v441 = vpop.permute.xlu0 %440
        %v443 = vmul.f32 %v441, %v433
        %v444 = vld [vmem:[#allocation5 + $0x4] sm:$0xf]
        %v445 = vld [vmem:[#allocation5 + $0x18] sm:$0xf]
        %v446 = vld [vmem:[#allocation5 + $0x2c] sm:$0xf]
        %v447 = vld [vmem:[#allocation5 + $0x40] sm:$0xf]
        %v448 = vld [vmem:[#allocation5 + $0x54] sm:$0xf]
        %v449 = vld [vmem:[#allocation5 + $0x68] sm:$0xf]
        %v450 = vld [vmem:[#allocation5 + $0x7c] sm:$0xf]
        %v451 = vld [vmem:[#allocation5 + $0x90] sm:$0xf]
        %v452 = vld [vmem:[#allocation5 + $0xa4] sm:$0xf]
        %v453 = vld [vmem:[#allocation5 + $0xb8] sm:$0xf]
        %v454 = vld [vmem:[#allocation5 + $0xcc] sm:$0xf]
        %v455 = vld [vmem:[#allocation5 + $0xe0] sm:$0xf]
        %v456 = vld [vmem:[#allocation5 + $0xf4] sm:$0xf]
        %v457 = vld [vmem:[#allocation5 + $0x108] sm:$0xf]
        %v458 = vld [vmem:[#allocation5 + $0x11c] sm:$0xf]
        %v459 = vld [vmem:[#allocation5 + $0x130] sm:$0xf]
        %v460 = vld [vmem:[%s2 + $0x1] sm:$0x1]
        %v462 = vlaneseq
        %v463 = vshrl.u32 %v462, 7
        %v464 = vsub.s32 0, %v463
        %v465 = vrot.slane %v460, %v464
        %v483 = vunpack.c.l.b16 %v444
        %v484 = vunpack.c.l.b16 %v445
        %v485 = vunpack.c.l.b16 %v446
        %v486 = vunpack.c.l.b16 %v447
        %v487 = vunpack.c.l.b16 %v448
        %v488 = vunpack.c.l.b16 %v449
        %v489 = vunpack.c.l.b16 %v450
        %v490 = vunpack.c.l.b16 %v451
        %v491 = vunpack.c.l.b16 %v452
        %v492 = vunpack.c.l.b16 %v453
        %v493 = vunpack.c.l.b16 %v454
        %v494 = vunpack.c.l.b16 %v455
        %v495 = vunpack.c.l.b16 %v456
        %v496 = vunpack.c.l.b16 %v457
        %v497 = vunpack.c.l.b16 %v458
        %v498 = vunpack.c.l.b16 %v459
        %v499 = vpack.c.b16 %v484, %v483
        %v500 = vpack.c.b16 %v486, %v485
        %v501 = vpack.c.b16 %v488, %v487
        %v502 = vpack.c.b16 %v490, %v489
        %v503 = vpack.c.b16 %v492, %v491
        %v504 = vpack.c.b16 %v494, %v493
        %v505 = vpack.c.b16 %v496, %v495
        %v506 = vpack.c.b16 %v498, %v497
        %515 = vmatprep.subr.bf16.mxu0 0
        %516 = vmatpush1.bf16.msra.mxu0 %v499
        %517 = vmatprep.subr.bf16.mxu0 0
        %518 = vmatpush1.bf16.msra.mxu0 %v500
        %519 = vmatprep.subr.bf16.mxu0 0
        %520 = vmatpush1.bf16.msra.mxu0 %v501
        %521 = vmatprep.subr.bf16.mxu0 0
        %522 = vmatpush1.bf16.msra.mxu0 %v502
        %523 = vmatprep.subr.bf16.mxu0 0
        %524 = vmatpush1.bf16.msra.mxu0 %v503
        %525 = vmatprep.subr.bf16.mxu0 0
        %526 = vmatpush1.bf16.msra.mxu0 %v504
        %527 = vmatprep.subr.bf16.mxu0 0
        %528 = vmatpush1.bf16.msra.mxu0 %v505
        %529 = vmatprep.subr.bf16.mxu0 0
        %530 = vmatpush1.bf16.msra.mxu0 %v506
        %531 = vmatprep.subr.bf16.mxu0 0
        %532 = vmatpush1.bf16.msra.mxu0 0
        %533 = vmatprep.subr.bf16.mxu0 0
        %534 = vmatpush1.bf16.msra.mxu0 0
        %535 = vmatprep.subr.bf16.mxu0 0
        %536 = vmatpush1.bf16.msra.mxu0 0
        %537 = vmatprep.subr.bf16.mxu0 0
        %538 = vmatpush1.bf16.msra.mxu0 0
        %539 = vmatprep.subr.bf16.mxu0 0
        %540 = vmatpush1.bf16.msra.mxu0 0
        %541 = vmatprep.subr.bf16.mxu0 0
        %542 = vmatpush1.bf16.msra.mxu0 0
        %543 = vmatprep.subr.bf16.mxu0 0
        %544 = vmatpush1.bf16.msra.mxu0 0
        %545 = vmatprep.subr.bf16.mxu0 0
        %546 = vmatpush1.bf16.msra.mxu0 0
        %547 = vmatprep.mubr.bf16.mxu0 0
        %548 = vmatmul.mubr.bf16.gmra.mrb[0].mxu0 %v202
        %v549 = vpop.f32.mrb[0].mxu0
        %v550 = vadd.f32 %v465, %v549
        %v551 = vpop.f32.mrb[0].mxu0
        %v552 = vpop.f32.mrb[0].mxu0
        %v553 = vpop.f32.mrb[0].mxu0
        %554 = vdwg.mxu0
        %555 = vset.pattern.permute.xlu0 1
        %556 = vperm.xlu0 %555, %v326
        %v557 = vpop.permute.xlu0 %556
        %v559 = vmul.f32 %v557, %v550
        %v560 = vadd.f32 %v443, %v559
        %v561 = vld [vmem:[#allocation5 + $0x8] sm:$0xf]
        %v562 = vld [vmem:[#allocation5 + $0x1c] sm:$0xf]
        %v563 = vld [vmem:[#allocation5 + $0x30] sm:$0xf]
        %v564 = vld [vmem:[#allocation5 + $0x44] sm:$0xf]
        %v565 = vld [vmem:[#allocation5 + $0x58] sm:$0xf]
        %v566 = vld [vmem:[#allocation5 + $0x6c] sm:$0xf]
        %v567 = vld [vmem:[#allocation5 + $0x80] sm:$0xf]
        %v568 = vld [vmem:[#allocation5 + $0x94] sm:$0xf]
        %v569 = vld [vmem:[#allocation5 + $0xa8] sm:$0xf]
        %v570 = vld [vmem:[#allocation5 + $0xbc] sm:$0xf]
        %v571 = vld [vmem:[#allocation5 + $0xd0] sm:$0xf]
        %v572 = vld [vmem:[#allocation5 + $0xe4] sm:$0xf]
        %v573 = vld [vmem:[#allocation5 + $0xf8] sm:$0xf]
        %v574 = vld [vmem:[#allocation5 + $0x10c] sm:$0xf]
        %v575 = vld [vmem:[#allocation5 + $0x120] sm:$0xf]
        %v576 = vld [vmem:[#allocation5 + $0x134] sm:$0xf]
        %v577 = vld [vmem:[%s2 + $0x2] sm:$0x1]
        %v579 = vlaneseq
        %v580 = vshrl.u32 %v579, 7
        %v581 = vsub.s32 0, %v580
        %v582 = vrot.slane %v577, %v581
        %v600 = vunpack.c.l.b16 %v561
        %v601 = vunpack.c.l.b16 %v562
        %v602 = vunpack.c.l.b16 %v563
        %v603 = vunpack.c.l.b16 %v564
        %v604 = vunpack.c.l.b16 %v565
        %v605 = vunpack.c.l.b16 %v566
        %v606 = vunpack.c.l.b16 %v567
        %v607 = vunpack.c.l.b16 %v568
        %v608 = vunpack.c.l.b16 %v569
        %v609 = vunpack.c.l.b16 %v570
        %v610 = vunpack.c.l.b16 %v571
        %v611 = vunpack.c.l.b16 %v572
        %v612 = vunpack.c.l.b16 %v573
        %v613 = vunpack.c.l.b16 %v574
        %v614 = vunpack.c.l.b16 %v575
        %v615 = vunpack.c.l.b16 %v576
        %v616 = vpack.c.b16 %v601, %v600
        %v617 = vpack.c.b16 %v603, %v602
        %v618 = vpack.c.b16 %v605, %v604
        %v619 = vpack.c.b16 %v607, %v606
        %v620 = vpack.c.b16 %v609, %v608
        %v621 = vpack.c.b16 %v611, %v610
        %v622 = vpack.c.b16 %v613, %v612
        %v623 = vpack.c.b16 %v615, %v614
        %632 = vmatprep.subr.bf16.mxu0 0
        %633 = vmatpush1.bf16.msra.mxu0 %v616
        %634 = vmatprep.subr.bf16.mxu0 0
        %635 = vmatpush1.bf16.msra.mxu0 %v617
        %636 = vmatprep.subr.bf16.mxu0 0
        %637 = vmatpush1.bf16.msra.mxu0 %v618
        %638 = vmatprep.subr.bf16.mxu0 0
        %639 = vmatpush1.bf16.msra.mxu0 %v619
        %640 = vmatprep.subr.bf16.mxu0 0
        %641 = vmatpush1.bf16.msra.mxu0 %v620
        %642 = vmatprep.subr.bf16.mxu0 0
        %643 = vmatpush1.bf16.msra.mxu0 %v621
        %644 = vmatprep.subr.bf16.mxu0 0
        %645 = vmatpush1.bf16.msra.mxu0 %v622
        %646 = vmatprep.subr.bf16.mxu0 0
        %647 = vmatpush1.bf16.msra.mxu0 %v623
        %648 = vmatprep.subr.bf16.mxu0 0
        %649 = vmatpush1.bf16.msra.mxu0 0
        %650 = vmatprep.subr.bf16.mxu0 0
        %651 = vmatpush1.bf16.msra.mxu0 0
        %652 = vmatprep.subr.bf16.mxu0 0
        %653 = vmatpush1.bf16.msra.mxu0 0
        %654 = vmatprep.subr.bf16.mxu0 0
        %655 = vmatpush1.bf16.msra.mxu0 0
        %656 = vmatprep.subr.bf16.mxu0 0
        %657 = vmatpush1.bf16.msra.mxu0 0
        %658 = vmatprep.subr.bf16.mxu0 0
        %659 = vmatpush1.bf16.msra.mxu0 0
        %660 = vmatprep.subr.bf16.mxu0 0
        %661 = vmatpush1.bf16.msra.mxu0 0
        %662 = vmatprep.subr.bf16.mxu0 0
        %663 = vmatpush1.bf16.msra.mxu0 0
        %664 = vmatprep.mubr.bf16.mxu0 0
        %665 = vmatmul.mubr.bf16.gmra.mrb[0].mxu0 %v202
        %v666 = vpop.f32.mrb[0].mxu0
        %v667 = vadd.f32 %v582, %v666
        %v668 = vpop.f32.mrb[0].mxu0
        %v669 = vpop.f32.mrb[0].mxu0
        %v670 = vpop.f32.mrb[0].mxu0
        %671 = vdwg.mxu0
        %672 = vset.pattern.permute.xlu0 2
        %673 = vperm.xlu0 %672, %v326
        %v674 = vpop.permute.xlu0 %673
        %v676 = vmul.f32 %v674, %v667
        %v677 = vadd.f32 %v560, %v676
        %v678 = vld [vmem:[#allocation5 + $0xc] sm:$0xf]
        %v679 = vld [vmem:[#allocation5 + $0x20] sm:$0xf]
        %v680 = vld [vmem:[#allocation5 + $0x34] sm:$0xf]
        %v681 = vld [vmem:[#allocation5 + $0x48] sm:$0xf]
        %v682 = vld [vmem:[#allocation5 + $0x5c] sm:$0xf]
        %v683 = vld [vmem:[#allocation5 + $0x70] sm:$0xf]
        %v684 = vld [vmem:[#allocation5 + $0x84] sm:$0xf]
        %v685 = vld [vmem:[#allocation5 + $0x98] sm:$0xf]
        %v686 = vld [vmem:[#allocation5 + $0xac] sm:$0xf]
        %v687 = vld [vmem:[#allocation5 + $0xc0] sm:$0xf]
        %v688 = vld [vmem:[#allocation5 + $0xd4] sm:$0xf]
        %v689 = vld [vmem:[#allocation5 + $0xe8] sm:$0xf]
        %v690 = vld [vmem:[#allocation5 + $0xfc] sm:$0xf]
        %v691 = vld [vmem:[#allocation5 + $0x110] sm:$0xf]
        %v692 = vld [vmem:[#allocation5 + $0x124] sm:$0xf]
        %v693 = vld [vmem:[#allocation5 + $0x138] sm:$0xf]
        %v694 = vld [vmem:[%s2 + $0x3] sm:$0x1]
        %v696 = vlaneseq
        %v697 = vshrl.u32 %v696, 7
        %v698 = vsub.s32 0, %v697
        %v699 = vrot.slane %v694, %v698
        %v717 = vunpack.c.l.b16 %v678
        %v718 = vunpack.c.l.b16 %v679
        %v719 = vunpack.c.l.b16 %v680
        %v720 = vunpack.c.l.b16 %v681
        %v721 = vunpack.c.l.b16 %v682
        %v722 = vunpack.c.l.b16 %v683
        %v723 = vunpack.c.l.b16 %v684
        %v724 = vunpack.c.l.b16 %v685
        %v725 = vunpack.c.l.b16 %v686
        %v726 = vunpack.c.l.b16 %v687
        %v727 = vunpack.c.l.b16 %v688
        %v728 = vunpack.c.l.b16 %v689
        %v729 = vunpack.c.l.b16 %v690
        %v730 = vunpack.c.l.b16 %v691
        %v731 = vunpack.c.l.b16 %v692
        %v732 = vunpack.c.l.b16 %v693
        %v733 = vpack.c.b16 %v718, %v717
        %v734 = vpack.c.b16 %v720, %v719
        %v735 = vpack.c.b16 %v722, %v721
        %v736 = vpack.c.b16 %v724, %v723
        %v737 = vpack.c.b16 %v726, %v725
        %v738 = vpack.c.b16 %v728, %v727
        %v739 = vpack.c.b16 %v730, %v729
        %v740 = vpack.c.b16 %v732, %v731
        %749 = vmatprep.subr.bf16.mxu0 0
        %750 = vmatpush1.bf16.msra.mxu0 %v733
        %751 = vmatprep.subr.bf16.mxu0 0
        %752 = vmatpush1.bf16.msra.mxu0 %v734
        %753 = vmatprep.subr.bf16.mxu0 0
        %754 = vmatpush1.bf16.msra.mxu0 %v735
        %755 = vmatprep.subr.bf16.mxu0 0
        %756 = vmatpush1.bf16.msra.mxu0 %v736
        %757 = vmatprep.subr.bf16.mxu0 0
        %758 = vmatpush1.bf16.msra.mxu0 %v737
        %759 = vmatprep.subr.bf16.mxu0 0
        %760 = vmatpush1.bf16.msra.mxu0 %v738
        %761 = vmatprep.subr.bf16.mxu0 0
        %762 = vmatpush1.bf16.msra.mxu0 %v739
        %763 = vmatprep.subr.bf16.mxu0 0
        %764 = vmatpush1.bf16.msra.mxu0 %v740
        %765 = vmatprep.subr.bf16.mxu0 0
        %766 = vmatpush1.bf16.msra.mxu0 0
        %767 = vmatprep.subr.bf16.mxu0 0
        %768 = vmatpush1.bf16.msra.mxu0 0
        %769 = vmatprep.subr.bf16.mxu0 0
        %770 = vmatpush1.bf16.msra.mxu0 0
        %771 = vmatprep.subr.bf16.mxu0 0
        %772 = vmatpush1.bf16.msra.mxu0 0
        %773 = vmatprep.subr.bf16.mxu0 0
        %774 = vmatpush1.bf16.msra.mxu0 0
        %775 = vmatprep.subr.bf16.mxu0 0
        %776 = vmatpush1.bf16.msra.mxu0 0
        %777 = vmatprep.subr.bf16.mxu0 0
        %778 = vmatpush1.bf16.msra.mxu0 0
        %779 = vmatprep.subr.bf16.mxu0 0
        %780 = vmatpush1.bf16.msra.mxu0 0
        %781 = vmatprep.mubr.bf16.mxu0 0
        %782 = vmatmul.mubr.bf16.gmra.mrb[0].mxu0 %v202
        %v783 = vpop.f32.mrb[0].mxu0
        %v784 = vadd.f32 %v699, %v783
        %v785 = vpop.f32.mrb[0].mxu0
        %v786 = vpop.f32.mrb[0].mxu0
        %v787 = vpop.f32.mrb[0].mxu0
        %788 = vdwg.mxu0
        %789 = vset.pattern.permute.xlu0 3
        %790 = vperm.xlu0 %789, %v326
        %v791 = vpop.permute.xlu0 %790
        %v793 = vmul.f32 %v791, %v784
        %v794 = vadd.f32 %v677, %v793
        %795 = vst [vmem:[%s200] sm:$0xff] %v794
        %s796 = sand.u32 %s97, 1
        %s797 = scalar_lea.sflag [#allocation4], %s796
        %s798 = sand.u32 %s97, 1
        %s799 = smul.addr %s798, 8
        %s800 = scalar_lea.vmem [#allocation7], %s799
        // Predicated region
        $region41: #{tpu_custom_call.1} parent=31 // pred_check
          %p801 = pneg %p107
        $region42: #{tpu_custom_call.1} parent=31 // pred_check_branch
          %803 = sbr.rel (%p801) target = $region44
        $region43: #{tpu_custom_call.1} parent=31 // pred_region
          %s805 = ssub.s32 128, 128
          %806 = vsyncadd %s797, %s805
          %s807 = smul.addr %s21, 128
          %s808 = scalar_lea.hbm %s3, %s807
          %s810 = sshll.u32 %s800, 4
          %s811 = int_to_ptr.vmem [resolvable:$true] %s810
          %813 = dma.vmem_to_hbm [thread:$0]  %s811, 128, %s808, %s797
        $region44: #{tpu_custom_call.1} parent=31 // pred_fallthru
          _
      $region32: #{tpu_custom_call.1} parent=5 // pred_fallthru
        _
      %p814 = scmp.le.s32.totalorder 2, %s16
      // Predicated region
      $region45: #{tpu_custom_call.1} parent=5 // pred_check
        %p815 = pneg %p814
      $region46: #{tpu_custom_call.1} parent=5 // pred_check_branch
        %817 = sbr.rel (%p815) target = $region48
      $region47: #{tpu_custom_call.1} parent=5 // pred_region
        %s818 = ssub.s32 %s16, 2
        // Predicated region
        $region49: #{tpu_custom_call.1} parent=47 // pred_check
          %p819 = pneg %p113
        $region50: #{tpu_custom_call.1} parent=47 // pred_check_branch
          %821 = sbr.rel (%p819) target = $region52
        $region51: #{tpu_custom_call.1} parent=47 // pred_region
          %s822 = sand.u32 %s98, 1
          %s823 = scalar_lea.sflag [#allocation4], %s822
          %s824 = sand.u32 %s98, 1
          %s825 = smul.addr %s824, 8
          %s826 = scalar_lea.vmem [#allocation7], %s825
          %827 = dma.done %s823, 128
        $region52: #{tpu_custom_call.1} parent=47 // pred_fallthru
          _
      $region48: #{tpu_custom_call.1} parent=5 // pred_fallthru
        _
    $region6: #{tpu_custom_call.1} parent=1 // loop_footer
      %s20 = sadd.s32 1, %s16
    $region7: #{tpu_custom_call.1} parent=1 // loop_footer_branch
      %15 = sbr.rel target = $region3
    $region8: #{tpu_custom_call.1} parent=1 // loop_exit
      _
    %828 = vsyncpa [#allocation3], 1
    %s829 = scalar_lea.sflag [#allocation3], 1
    %830 = vsyncpa %s829, 1
    %831 = vsyncpa [#allocation6], 1
    %832 = vsyncpa [#allocation4], 1
    %s833 = scalar_lea.sflag [#allocation4], 1
    %834 = vsyncpa %s833, 1

</llo_original>
